<compile_context>
chip_gen: v5e
topology: v5e:2x2
jax: 0.10.0
libtpu: 0.0.40
codegen_flags: <defaults>
</compile_context>

<pallas_src>
import jax
import jax.numpy as jnp
from jax import lax
from jax.experimental import pallas as pl
from jax.experimental.pallas import tpu as pltpu


def mlp_kernel(x_ref, w1_ref, b1_ref, w2_ref, b2_ref, w3_ref, b3_ref, o_ref):
    # Per grid step (T = batch_tile):
    #   x:  (T, 4)   f32  (batch-major, straight from HBM)
    #   w1: (128, 4) bf16,  b1: (128, 1) f32
    #   w2: (64,128) bf16,  b2: (64, 1)  f32
    #   w3: (1, 64)  bf16,  b3: (1, 1)   f32
    #   o:  (1, T)   f32   (lane-dense: batch on the 128-wide lane axis)
    x = x_ref[...].astype(jnp.bfloat16)                               # (T, 4)

    # fc1, computed transposed: h1 = W1 @ x^T -> (128, T).
    # NT-form dot_general (contract last dims of both operands), so the layout
    # change rides the MXU feed path instead of a separate wrapper HBM pass.
    h1 = lax.dot_general(
        w1_ref[...], x,
        dimension_numbers=(((1,), (1,)), ((), ())),
        preferred_element_type=jnp.float32) + b1_ref[...]
    h1 = jnp.maximum(h1, 0.0).astype(jnp.bfloat16)                    # relu, (128, T)

    # fc2: (64,128) @ (128,T) -> (64,T)
    h2 = jnp.dot(w2_ref[...], h1, preferred_element_type=jnp.float32) + b2_ref[...]
    h2 = jnp.maximum(h2, 0.0).astype(jnp.bfloat16)                    # relu, (64, T)

    # fc3: (1,64) @ (64,T) -> (1,T)
    z = jnp.dot(w3_ref[...], h2, preferred_element_type=jnp.float32) + b3_ref[...]

    # sigmoid = 1 / (1 + exp(-z)); clamp so exp never produces inf, then use the
    # EUP exp + EUP approx reciprocal (keeps the VALU free).
    z = jnp.clip(z, -30.0, 30.0)
    o_ref[...] = pl.reciprocal(1.0 + jnp.exp(-z), approx=True)


def _round_up(v, m):
    return ((v + m - 1) // m) * m


def _choose_tiling(n, batch_tile):
    """Pick (batch_tile, n_pad, num_tiles) — size-dependent dispatch."""
    if batch_tile is None:
        if n <= 4096:
            # Small batch: a single grid step; multi-step pipelining would only
            # add ~0.35us/step of overhead on top of microseconds of work.
            batch_tile = _round_up(max(n, 8), 256)
        else:
            # Large batch: big tiles amortize per-step overhead; >=2 tiles so
            # both v7x TensorCores get work.
            batch_tile = 4096
    # Lane/sublane alignment + VMEM cap (per-step footprint ~5 MB at T=4096,
    # ~20 MB at T=16384 — keep comfortably inside v7x's 64 MiB physical VMEM).
    batch_tile = min(_round_up(batch_tile, 256), 8192)
    n_pad = _round_up(n, batch_tile)
    num_tiles = n_pad // batch_tile
    # v7x megacore: keep the grid even so the two TensorCores split evenly.
    if num_tiles > 1 and num_tiles % 2 == 1:
        num_tiles += 1
        n_pad = num_tiles * batch_tile
    return batch_tile, n_pad, num_tiles


def mlp_forward(x, params, *, batch_tile=None):
    """x: (N, 4) float32. params in PyTorch layout (w: (out,in), b: (out,)). Returns (N, 1) f32."""
    w1, b1, w2, b2, w3, b3 = params
    n, d_in = x.shape
    d_h1, d_h2, d_out = w1.shape[0], w2.shape[0], w3.shape[0]

    batch_tile, n_pad, num_tiles = _choose_tiling(n, batch_tile)
    if n_pad != n:
        x = jnp.pad(x, ((0, n_pad - n), (0, 0)))

    # Tiny one-time weight/bias preps (constants; NOT a per-batch pass over x).
    w1b = w1.astype(jnp.bfloat16)                                  # (128, 4)
    w2b = w2.astype(jnp.bfloat16)                                  # (64, 128)
    w3b = w3.astype(jnp.bfloat16)                                  # (1, 64)
    b1c = b1.reshape(d_h1, 1).astype(jnp.float32)                  # (128, 1)
    b2c = b2.reshape(d_h2, 1).astype(jnp.float32)                  # (64, 1)
    b3c = b3.reshape(d_out, 1).astype(jnp.float32)                 # (1, 1)

    out_t = pl.pallas_call(
        mlp_kernel,
        out_shape=jax.ShapeDtypeStruct((d_out, n_pad), jnp.float32),
        grid_spec=pltpu.PrefetchScalarGridSpec(
            num_scalar_prefetch=0,
            grid=(num_tiles,),
            in_specs=[
                # activations: tiled along the batch (sublane) axis, fed as-stored
                pl.BlockSpec((batch_tile, d_in), lambda i: (i, 0)),
                # weights / biases: full arrays, constant block index (resident)
                pl.BlockSpec((d_h1, d_in), lambda i: (0, 0)),
                pl.BlockSpec((d_h1, 1), lambda i: (0, 0)),
                pl.BlockSpec((d_h2, d_h1), lambda i: (0, 0)),
                pl.BlockSpec((d_h2, 1), lambda i: (0, 0)),
                pl.BlockSpec((d_out, d_h2), lambda i: (0, 0)),
                pl.BlockSpec((d_out, 1), lambda i: (0, 0)),
            ],
            # lane-dense output: batch on the lane axis -> unmasked stores
            out_specs=pl.BlockSpec((d_out, batch_tile), lambda i: (0, i)),
        ),
        compiler_params=pltpu.CompilerParams(
            dimension_semantics=("parallel",)),   # batch tiles shard across v7x's 2 TCs
    )(x, w1b, b1c, w2b, b2c, w3b, b3c)

    # (1, N) -> (N, 1): same memory order, pure metadata change.
    return out_t[:, :n].T


def init_params(key):
    # PyTorch nn.Linear default init: U(-1/sqrt(fan_in), 1/sqrt(fan_in)),
    # stored in PyTorch layout: weight (out_features, in_features), bias (out_features,).
    def linear(key, fan_in, fan_out):
        kw, kb = jax.random.split(key)
        bound = 1.0 / jnp.sqrt(fan_in)
        w = jax.random.uniform(kw, (fan_out, fan_in), jnp.float32, -bound, bound)
        b = jax.random.uniform(kb, (fan_out,), jnp.float32, -bound, bound)
        return w, b

    k1, k2, k3 = jax.random.split(key, 3)
    w1, b1 = linear(k1, 4, 128)
    w2, b2 = linear(k2, 128, 64)
    w3, b3 = linear(k3, 64, 1)
    return (w1, b1, w2, b2, w3, b3)


def mlp_reference_f32(x, params):
    # Pure f32 reference (PyTorch semantics).
    w1, b1, w2, b2, w3, b3 = params
    h1 = jnp.maximum(x @ w1.T + b1, 0.0)
    h2 = jnp.maximum(h1 @ w2.T + b2, 0.0)
    return jax.nn.sigmoid(h2 @ w3.T + b3)


def mlp_reference_bf16(x, params):
    # Mirrors the kernel's numerics: bf16 matmul operands, f32 accumulation.
    w1, b1, w2, b2, w3, b3 = params
    xb = x.astype(jnp.bfloat16)
    h1 = jnp.dot(xb, w1.T.astype(jnp.bfloat16), preferred_element_type=jnp.float32) + b1
    h1 = jnp.maximum(h1, 0.0).astype(jnp.bfloat16)
    h2 = jnp.dot(h1, w2.T.astype(jnp.bfloat16), preferred_element_type=jnp.float32) + b2
    h2 = jnp.maximum(h2, 0.0).astype(jnp.bfloat16)
    z = jnp.dot(h2, w3.T.astype(jnp.bfloat16), preferred_element_type=jnp.float32) + b3
    return jax.nn.sigmoid(z)


if __name__ == "__main__":
    key = jax.random.PRNGKey(0)
    kx, kp = jax.random.split(key)

    batch = 1024
    x = jax.random.normal(kx, (batch, 4), dtype=jnp.float32)
    params = init_params(kp)

    ref_bf16 = mlp_reference_bf16(x, params)
    ref_f32 = mlp_reference_f32(x, params)

    # Small-batch path: auto tiling -> one grid step covering the whole batch.
    out = jax.block_until_ready(mlp_forward(x, params))
    assert out.shape == (batch, 1)
    assert jnp.allclose(out, ref_bf16, atol=1e-2), float(jnp.max(jnp.abs(out - ref_bf16)))
    assert jnp.allclose(out, ref_f32, atol=5e-2), float(jnp.max(jnp.abs(out - ref_f32)))

    # Multi-tile path (exercises the parallel grid used for large batches).
    out_tiled = jax.block_until_ready(mlp_forward(x, params, batch_tile=256))
    assert out_tiled.shape == (batch, 1)
    assert jnp.allclose(out_tiled, ref_bf16, atol=1e-2), float(jnp.max(jnp.abs(out_tiled - ref_bf16)))

    print("KERNEL_OK")
</pallas_src>

<mosaic_0001>
module attributes {stable_mosaic.version = 11 : i64} {
  func.func @mlp_kernel(%arg0: i32, %arg1: memref<1024x4xf32, #tpu.memory_space<vmem>>, %arg2: memref<128x4xbf16, #tpu.memory_space<vmem>>, %arg3: memref<128x1xf32, #tpu.memory_space<vmem>>, %arg4: memref<64x128xbf16, #tpu.memory_space<vmem>>, %arg5: memref<64x1xf32, #tpu.memory_space<vmem>>, %arg6: memref<1x64xbf16, #tpu.memory_space<vmem>>, %arg7: memref<1x1xf32, #tpu.memory_space<vmem>>, %arg8: memref<1x1024xf32, #tpu.memory_space<vmem>>) attributes {dimension_semantics = [#tpu.dimension_semantics<parallel>], iteration_bounds = array<i64: 1>, scalar_prefetch = 0 : i64, scratch_operands = 0 : i64, tpu.core_type = #tpu.core_type<tc>, window_params = [{transform_indices = @transform_0, window_bounds = array<i64: 1024, 4>}, {pipeline_mode = #tpu.pipeline_mode<synchronous>, transform_indices = @transform_1, window_bounds = array<i64: 128, 4>}, {pipeline_mode = #tpu.pipeline_mode<synchronous>, transform_indices = @transform_2, window_bounds = array<i64: 128, 1>}, {pipeline_mode = #tpu.pipeline_mode<synchronous>, transform_indices = @transform_3, window_bounds = array<i64: 64, 128>}, {pipeline_mode = #tpu.pipeline_mode<synchronous>, transform_indices = @transform_4, window_bounds = array<i64: 64, 1>}, {pipeline_mode = #tpu.pipeline_mode<synchronous>, transform_indices = @transform_5, window_bounds = array<i64: 1, 64>}, {pipeline_mode = #tpu.pipeline_mode<synchronous>, transform_indices = @transform_6, window_bounds = array<i64: 1, 1>}, {transform_indices = @transform_7, window_bounds = array<i64: 1, 1024>}]} {
    %c0 = arith.constant 0 : index
    %c0_0 = arith.constant 0 : index
    %0 = vector.load %arg1[%c0, %c0_0] : memref<1024x4xf32, #tpu.memory_space<vmem>>, vector<1024x4xf32>
    %1 = arith.truncf %0 : vector<1024x4xf32> to vector<1024x4xbf16>
    %c0_1 = arith.constant 0 : index
    %c0_2 = arith.constant 0 : index
    %2 = vector.load %arg2[%c0_1, %c0_2] : memref<128x4xbf16, #tpu.memory_space<vmem>>, vector<128x4xbf16>
    %cst = arith.constant dense<0.000000e+00> : vector<128x1024xf32>
    %3 = tpu.matmul %2, %1, %cst {dimension_numbers = #tpu.dot_dimension_numbers<[1], [1], [0], [0], [0, 0, 1, 0], [], []>} : vector<128x4xbf16>, vector<1024x4xbf16>, vector<128x1024xf32> -> vector<128x1024xf32>
    %c0_3 = arith.constant 0 : index
    %c0_4 = arith.constant 0 : index
    %4 = vector.load %arg3[%c0_3, %c0_4] : memref<128x1xf32, #tpu.memory_space<vmem>>, vector<128x1xf32>
    %5 = vector.broadcast %4 : vector<128x1xf32> to vector<128x1024xf32>
    %6 = arith.addf %3, %5 : vector<128x1024xf32>
    %cst_5 = arith.constant 0.000000e+00 : f32
    %7 = vector.broadcast %cst_5 : f32 to vector<128x1024xf32>
    %8 = arith.maximumf %6, %7 : vector<128x1024xf32>
    %9 = arith.truncf %8 : vector<128x1024xf32> to vector<128x1024xbf16>
    %c0_6 = arith.constant 0 : index
    %c0_7 = arith.constant 0 : index
    %10 = vector.load %arg4[%c0_6, %c0_7] : memref<64x128xbf16, #tpu.memory_space<vmem>>, vector<64x128xbf16>
    %cst_8 = arith.constant dense<0.000000e+00> : vector<64x1024xf32>
    %11 = tpu.matmul %10, %9, %cst_8 {dimension_numbers = #tpu.dot_dimension_numbers<[1], [0], [0], [1], [0, 0, 1, 1], [], []>} : vector<64x128xbf16>, vector<128x1024xbf16>, vector<64x1024xf32> -> vector<64x1024xf32>
    %c0_9 = arith.constant 0 : index
    %c0_10 = arith.constant 0 : index
    %12 = vector.load %arg5[%c0_9, %c0_10] : memref<64x1xf32, #tpu.memory_space<vmem>>, vector<64x1xf32>
    %13 = vector.broadcast %12 : vector<64x1xf32> to vector<64x1024xf32>
    %14 = arith.addf %11, %13 : vector<64x1024xf32>
    %cst_11 = arith.constant 0.000000e+00 : f32
    %15 = vector.broadcast %cst_11 : f32 to vector<64x1024xf32>
    %16 = arith.maximumf %14, %15 : vector<64x1024xf32>
    %17 = arith.truncf %16 : vector<64x1024xf32> to vector<64x1024xbf16>
    %c0_12 = arith.constant 0 : index
    %c0_13 = arith.constant 0 : index
    %18 = vector.load %arg6[%c0_12, %c0_13] : memref<1x64xbf16, #tpu.memory_space<vmem>>, vector<1x64xbf16>
    %cst_14 = arith.constant dense<0.000000e+00> : vector<1x1024xf32>
    %19 = tpu.matmul %18, %17, %cst_14 {dimension_numbers = #tpu.dot_dimension_numbers<[1], [0], [0], [1], [0, 0, 1, 1], [], []>} : vector<1x64xbf16>, vector<64x1024xbf16>, vector<1x1024xf32> -> vector<1x1024xf32>
    %c0_15 = arith.constant 0 : index
    %c0_16 = arith.constant 0 : index
    %20 = vector.load %arg7[%c0_15, %c0_16] : memref<1x1xf32, #tpu.memory_space<vmem>>, vector<1x1xf32>
    %21 = vector.broadcast %20 : vector<1x1xf32> to vector<1x1024xf32>
    %22 = arith.addf %19, %21 : vector<1x1024xf32>
    %cst_17 = arith.constant -3.000000e+01 : f32
    %cst_18 = arith.constant 3.000000e+01 : f32
    %23 = vector.broadcast %cst_17 : f32 to vector<1x1024xf32>
    %24 = arith.maximumf %23, %22 : vector<1x1024xf32>
    %25 = vector.broadcast %cst_18 : f32 to vector<1x1024xf32>
    %26 = arith.minimumf %25, %24 : vector<1x1024xf32>
    %cst_19 = arith.constant 0.000000e+00 : f32
    %27 = vector.broadcast %cst_19 : f32 to vector<1x1024xf32>
    %28 = arith.subf %27, %26 : vector<1x1024xf32>
    %29 = math.exp %28 : vector<1x1024xf32>
    %cst_20 = arith.constant 1.000000e+00 : f32
    %30 = vector.broadcast %cst_20 : f32 to vector<1x1024xf32>
    %31 = arith.addf %30, %29 : vector<1x1024xf32>
    %32 = tpu.reciprocal %31 {approx = true} : vector<1x1024xf32> -> vector<1x1024xf32>
    %c0_21 = arith.constant 0 : index
    %c0_22 = arith.constant 0 : index
    %33 = vector.load %arg8[%c0_21, %c0_22] : memref<1x1024xf32, #tpu.memory_space<vmem>>, vector<1x1024xf32>
    tpu.vector_store %arg8[%c0_21, %c0_22], %32 {strides = array<i32>} : memref<1x1024xf32, #tpu.memory_space<vmem>>, vector<1x1024xf32>,
    return
  }
  func.func @transform_0(%arg0: i32) -> (i32, i32) {
    %c0_i32 = arith.constant 0 : i32
    %c0_i32_0 = arith.constant 0 : i32
    return %arg0, %c0_i32 : i32, i32
  }
  func.func @transform_1(%arg0: i32) -> (i32, i32) {
    %c0_i32 = arith.constant 0 : i32
    %c0_i32_0 = arith.constant 0 : i32
    %c0_i32_1 = arith.constant 0 : i32
    return %c0_i32, %c0_i32_0 : i32, i32
  }
  func.func @transform_2(%arg0: i32) -> (i32, i32) {
    %c0_i32 = arith.constant 0 : i32
    %c0_i32_0 = arith.constant 0 : i32
    %c0_i32_1 = arith.constant 0 : i32
    return %c0_i32, %c0_i32_0 : i32, i32
  }
  func.func @transform_3(%arg0: i32) -> (i32, i32) {
    %c0_i32 = arith.constant 0 : i32
    %c0_i32_0 = arith.constant 0 : i32
    %c0_i32_1 = arith.constant 0 : i32
    return %c0_i32, %c0_i32_0 : i32, i32
  }
  func.func @transform_4(%arg0: i32) -> (i32, i32) {
    %c0_i32 = arith.constant 0 : i32
    %c0_i32_0 = arith.constant 0 : i32
    %c0_i32_1 = arith.constant 0 : i32
    return %c0_i32, %c0_i32_0 : i32, i32
  }
  func.func @transform_5(%arg0: i32) -> (i32, i32) {
    %c0_i32 = arith.constant 0 : i32
    %c0_i32_0 = arith.constant 0 : i32
    %c0_i32_1 = arith.constant 0 : i32
    return %c0_i32, %c0_i32_0 : i32, i32
  }
  func.func @transform_6(%arg0: i32) -> (i32, i32) {
    %c0_i32 = arith.constant 0 : i32
    %c0_i32_0 = arith.constant 0 : i32
    %c0_i32_1 = arith.constant 0 : i32
    return %c0_i32, %c0_i32_0 : i32, i32
  }
  func.func @transform_7(%arg0: i32) -> (i32, i32) {
    %c0_i32 = arith.constant 0 : i32
    %c0_i32_0 = arith.constant 0 : i32
    return %c0_i32, %arg0 : i32, i32
  }
}

</mosaic_0001>

<llo_original>
// kernel: tpu_custom_call.1
$region0: #{tpu_custom_call.1}
  #allocation0 [shape = 'u32[]', space=smem, size = 0x4, offset = 0x4, fixed_abs, tag = 'smem constant byte address 0x4 - core index']
  #allocation1 [shape = 'u32[72,128]{1,0:T(1,128)}', space=vmem, size = 0x9000, scoped, tag = 'internal scratch']
  #allocation2 [shape = 'f32[1,1]{1,0:T(1,128)S(1)}', space=vmem, size = 0x200, scoped, tag = 'scoped memory for tpu_custom_call.1']
  %s0 = inlined_call_operand.vmem [shape: f32[1024,4], index: 0, kind: input, shape index: {}]
  %s1 = inlined_call_operand.vmem [shape: bf16[128,4], index: 1, kind: input, shape index: {}]
  %s2 = inlined_call_operand.vmem [shape: f32[128,1], index: 2, kind: input, shape index: {}]
  %s3 = inlined_call_operand.vmem [shape: bf16[64,128], index: 3, kind: input, shape index: {}]
  %s4 = inlined_call_operand.vmem [shape: f32[64,1], index: 4, kind: input, shape index: {}]
  %s5 = inlined_call_operand.vmem [shape: bf16[1,64], index: 5, kind: input, shape index: {}]
  %s6 = inlined_call_operand.<no memory space> [shape: f32[1,1], index: 6, kind: input, shape index: {}]
  %s7 = inlined_call_operand.hbm [shape: f32[1,1024], index: 7, kind: output, shape index: {}]
  %s8 = sld [smem:[#allocation0]]
  $region38: #{tpu_custom_call.1} parent=0
    _
  %s10 = ssub.s32 1, %s8
  %s11 = scalar_select 0, %s10, %s8
  %v12 = vstv %s6
  %13 = vst [vmem:[#allocation2] sm:$0x1] %v12
  $region1: #{tpu_custom_call.1} parent=0
    #allocation3 [shape = 'u8[4096]{0}', space=vmem, size = 0x1000, scoped, tag = 'output window, operand 0, single buffered']
    #allocation4 [shape = 's32[1]{0}', space=sflag, size = 0x4, scoped, tag = 'scoped memory for tpu_custom_call.1']
    %14 = vsyncpa [#allocation4], 0
    // Predicated region
    $region2: #{tpu_custom_call.1} parent=1 // pred_check
      _
    $region3: #{tpu_custom_call.1} parent=1 // pred_check_branch
      %16 = sbr.rel (0) target = $region5
    $region4: #{tpu_custom_call.1} parent=1 // pred_region
      _
    $region5: #{tpu_custom_call.1} parent=1 // pred_fallthru
      _
    // Predicated region
    $region6: #{tpu_custom_call.1} parent=1 // pred_check
      _
    $region7: #{tpu_custom_call.1} parent=1 // pred_check_branch
      %18 = sbr.rel (0) target = $region9
    $region8: #{tpu_custom_call.1} parent=1 // pred_region
      _
    $region9: #{tpu_custom_call.1} parent=1 // pred_fallthru
      _
    // Predicated region
    $region10: #{tpu_custom_call.1} parent=1 // pred_check
      _
    $region11: #{tpu_custom_call.1} parent=1 // pred_check_branch
      %20 = sbr.rel (0) target = $region13
    $region12: #{tpu_custom_call.1} parent=1 // pred_region
      _
    $region13: #{tpu_custom_call.1} parent=1 // pred_fallthru
      _
    // Predicated region
    $region14: #{tpu_custom_call.1} parent=1 // pred_check
      _
    $region15: #{tpu_custom_call.1} parent=1 // pred_check_branch
      %22 = sbr.rel (0) target = $region17
    $region16: #{tpu_custom_call.1} parent=1 // pred_region
      _
    $region17: #{tpu_custom_call.1} parent=1 // pred_fallthru
      _
    // Predicated region
    $region18: #{tpu_custom_call.1} parent=1 // pred_check
      _
    $region19: #{tpu_custom_call.1} parent=1 // pred_check_branch
      %24 = sbr.rel (0) target = $region21
    $region20: #{tpu_custom_call.1} parent=1 // pred_region
      _
    $region21: #{tpu_custom_call.1} parent=1 // pred_fallthru
      _
    // Predicated region
    $region22: #{tpu_custom_call.1} parent=1 // pred_check
      _
    $region23: #{tpu_custom_call.1} parent=1 // pred_check_branch
      %26 = sbr.rel (0) target = $region25
    $region24: #{tpu_custom_call.1} parent=1 // pred_region
      _
    $region25: #{tpu_custom_call.1} parent=1 // pred_fallthru
      _
    // Predicated region
    $region26: #{tpu_custom_call.1} parent=1 // pred_check
      _
    $region27: #{tpu_custom_call.1} parent=1 // pred_check_branch
      %28 = sbr.rel (0) target = $region29
    $region28: #{tpu_custom_call.1} parent=1 // pred_region
      _
    $region29: #{tpu_custom_call.1} parent=1 // pred_fallthru
      _
    %v30 = vld [vmem:[%s0] sm:$0xff]
    %v31 = vld [vmem:[%s0 + $0x8] sm:$0xff]
    %v32 = vld [vmem:[%s0 + $0x10] sm:$0xff]
    %v33 = vld [vmem:[%s0 + $0x18] sm:$0xff]
    %v34 = vld [vmem:[%s0 + $0x20] sm:$0xff]
    %v35 = vld [vmem:[%s0 + $0x28] sm:$0xff]
    %v36 = vld [vmem:[%s0 + $0x30] sm:$0xff]
    %v37 = vld [vmem:[%s0 + $0x38] sm:$0xff]
    %v38 = vld [vmem:[%s0 + $0x40] sm:$0xff]
    %v39 = vld [vmem:[%s0 + $0x48] sm:$0xff]
    %v40 = vld [vmem:[%s0 + $0x50] sm:$0xff]
    %v41 = vld [vmem:[%s0 + $0x58] sm:$0xff]
    %v42 = vld [vmem:[%s0 + $0x60] sm:$0xff]
    %v43 = vld [vmem:[%s0 + $0x68] sm:$0xff]
    %v44 = vld [vmem:[%s0 + $0x70] sm:$0xff]
    %v45 = vld [vmem:[%s0 + $0x78] sm:$0xff]
    %v46 = vld [vmem:[%s0 + $0x80] sm:$0xff]
    %v47 = vld [vmem:[%s0 + $0x88] sm:$0xff]
    %v48 = vld [vmem:[%s0 + $0x90] sm:$0xff]
    %v49 = vld [vmem:[%s0 + $0x98] sm:$0xff]
    %v50 = vld [vmem:[%s0 + $0xa0] sm:$0xff]
    %v51 = vld [vmem:[%s0 + $0xa8] sm:$0xff]
    %v52 = vld [vmem:[%s0 + $0xb0] sm:$0xff]
    %v53 = vld [vmem:[%s0 + $0xb8] sm:$0xff]
    %v54 = vld [vmem:[%s0 + $0xc0] sm:$0xff]
    %v55 = vld [vmem:[%s0 + $0xc8] sm:$0xff]
    %v56 = vld [vmem:[%s0 + $0xd0] sm:$0xff]
    %v57 = vld [vmem:[%s0 + $0xd8] sm:$0xff]
    %v58 = vld [vmem:[%s0 + $0xe0] sm:$0xff]
    %v59 = vld [vmem:[%s0 + $0xe8] sm:$0xff]
    %v60 = vld [vmem:[%s0 + $0xf0] sm:$0xff]
    %v61 = vld [vmem:[%s0 + $0xf8] sm:$0xff]
    %v62 = vld [vmem:[%s0 + $0x100] sm:$0xff]
    %v63 = vld [vmem:[%s0 + $0x108] sm:$0xff]
    %v64 = vld [vmem:[%s0 + $0x110] sm:$0xff]
    %v65 = vld [vmem:[%s0 + $0x118] sm:$0xff]
    %v66 = vld [vmem:[%s0 + $0x120] sm:$0xff]
    %v67 = vld [vmem:[%s0 + $0x128] sm:$0xff]
    %v68 = vld [vmem:[%s0 + $0x130] sm:$0xff]
    %v69 = vld [vmem:[%s0 + $0x138] sm:$0xff]
    %v70 = vld [vmem:[%s0 + $0x140] sm:$0xff]
    %v71 = vld [vmem:[%s0 + $0x148] sm:$0xff]
    %v72 = vld [vmem:[%s0 + $0x150] sm:$0xff]
    %v73 = vld [vmem:[%s0 + $0x158] sm:$0xff]
    %v74 = vld [vmem:[%s0 + $0x160] sm:$0xff]
    %v75 = vld [vmem:[%s0 + $0x168] sm:$0xff]
    %v76 = vld [vmem:[%s0 + $0x170] sm:$0xff]
    %v77 = vld [vmem:[%s0 + $0x178] sm:$0xff]
    %v78 = vld [vmem:[%s0 + $0x180] sm:$0xff]
    %v79 = vld [vmem:[%s0 + $0x188] sm:$0xff]
    %v80 = vld [vmem:[%s0 + $0x190] sm:$0xff]
    %v81 = vld [vmem:[%s0 + $0x198] sm:$0xff]
    %v82 = vld [vmem:[%s0 + $0x1a0] sm:$0xff]
    %v83 = vld [vmem:[%s0 + $0x1a8] sm:$0xff]
    %v84 = vld [vmem:[%s0 + $0x1b0] sm:$0xff]
    %v85 = vld [vmem:[%s0 + $0x1b8] sm:$0xff]
    %v86 = vld [vmem:[%s0 + $0x1c0] sm:$0xff]
    %v87 = vld [vmem:[%s0 + $0x1c8] sm:$0xff]
    %v88 = vld [vmem:[%s0 + $0x1d0] sm:$0xff]
    %v89 = vld [vmem:[%s0 + $0x1d8] sm:$0xff]
    %v90 = vld [vmem:[%s0 + $0x1e0] sm:$0xff]
    %v91 = vld [vmem:[%s0 + $0x1e8] sm:$0xff]
    %v92 = vld [vmem:[%s0 + $0x1f0] sm:$0xff]
    %v93 = vld [vmem:[%s0 + $0x1f8] sm:$0xff]
    %v94 = vld [vmem:[%s0 + $0x200] sm:$0xff]
    %v95 = vld [vmem:[%s0 + $0x208] sm:$0xff]
    %v96 = vld [vmem:[%s0 + $0x210] sm:$0xff]
    %v97 = vld [vmem:[%s0 + $0x218] sm:$0xff]
    %v98 = vld [vmem:[%s0 + $0x220] sm:$0xff]
    %v99 = vld [vmem:[%s0 + $0x228] sm:$0xff]
    %v100 = vld [vmem:[%s0 + $0x230] sm:$0xff]
    %v101 = vld [vmem:[%s0 + $0x238] sm:$0xff]
    %v102 = vld [vmem:[%s0 + $0x240] sm:$0xff]
    %v103 = vld [vmem:[%s0 + $0x248] sm:$0xff]
    %v104 = vld [vmem:[%s0 + $0x250] sm:$0xff]
    %v105 = vld [vmem:[%s0 + $0x258] sm:$0xff]
    %v106 = vld [vmem:[%s0 + $0x260] sm:$0xff]
    %v107 = vld [vmem:[%s0 + $0x268] sm:$0xff]
    %v108 = vld [vmem:[%s0 + $0x270] sm:$0xff]
    %v109 = vld [vmem:[%s0 + $0x278] sm:$0xff]
    %v110 = vld [vmem:[%s0 + $0x280] sm:$0xff]
    %v111 = vld [vmem:[%s0 + $0x288] sm:$0xff]
    %v112 = vld [vmem:[%s0 + $0x290] sm:$0xff]
    %v113 = vld [vmem:[%s0 + $0x298] sm:$0xff]
    %v114 = vld [vmem:[%s0 + $0x2a0] sm:$0xff]
    %v115 = vld [vmem:[%s0 + $0x2a8] sm:$0xff]
    %v116 = vld [vmem:[%s0 + $0x2b0] sm:$0xff]
    %v117 = vld [vmem:[%s0 + $0x2b8] sm:$0xff]
    %v118 = vld [vmem:[%s0 + $0x2c0] sm:$0xff]
    %v119 = vld [vmem:[%s0 + $0x2c8] sm:$0xff]
    %v120 = vld [vmem:[%s0 + $0x2d0] sm:$0xff]
    %v121 = vld [vmem:[%s0 + $0x2d8] sm:$0xff]
    %v122 = vld [vmem:[%s0 + $0x2e0] sm:$0xff]
    %v123 = vld [vmem:[%s0 + $0x2e8] sm:$0xff]
    %v124 = vld [vmem:[%s0 + $0x2f0] sm:$0xff]
    %v125 = vld [vmem:[%s0 + $0x2f8] sm:$0xff]
    %v126 = vld [vmem:[%s0 + $0x300] sm:$0xff]
    %v127 = vld [vmem:[%s0 + $0x308] sm:$0xff]
    %v128 = vld [vmem:[%s0 + $0x310] sm:$0xff]
    %v129 = vld [vmem:[%s0 + $0x318] sm:$0xff]
    %v130 = vld [vmem:[%s0 + $0x320] sm:$0xff]
    %v131 = vld [vmem:[%s0 + $0x328] sm:$0xff]
    %v132 = vld [vmem:[%s0 + $0x330] sm:$0xff]
    %v133 = vld [vmem:[%s0 + $0x338] sm:$0xff]
    %v134 = vld [vmem:[%s0 + $0x340] sm:$0xff]
    %v135 = vld [vmem:[%s0 + $0x348] sm:$0xff]
    %v136 = vld [vmem:[%s0 + $0x350] sm:$0xff]
    %v137 = vld [vmem:[%s0 + $0x358] sm:$0xff]
    %v138 = vld [vmem:[%s0 + $0x360] sm:$0xff]
    %v139 = vld [vmem:[%s0 + $0x368] sm:$0xff]
    %v140 = vld [vmem:[%s0 + $0x370] sm:$0xff]
    %v141 = vld [vmem:[%s0 + $0x378] sm:$0xff]
    %v142 = vld [vmem:[%s0 + $0x380] sm:$0xff]
    %v143 = vld [vmem:[%s0 + $0x388] sm:$0xff]
    %v144 = vld [vmem:[%s0 + $0x390] sm:$0xff]
    %v145 = vld [vmem:[%s0 + $0x398] sm:$0xff]
    %v146 = vld [vmem:[%s0 + $0x3a0] sm:$0xff]
    %v147 = vld [vmem:[%s0 + $0x3a8] sm:$0xff]
    %v148 = vld [vmem:[%s0 + $0x3b0] sm:$0xff]
    %v149 = vld [vmem:[%s0 + $0x3b8] sm:$0xff]
    %v150 = vld [vmem:[%s0 + $0x3c0] sm:$0xff]
    %v151 = vld [vmem:[%s0 + $0x3c8] sm:$0xff]
    %v152 = vld [vmem:[%s0 + $0x3d0] sm:$0xff]
    %v153 = vld [vmem:[%s0 + $0x3d8] sm:$0xff]
    %v154 = vld [vmem:[%s0 + $0x3e0] sm:$0xff]
    %v155 = vld [vmem:[%s0 + $0x3e8] sm:$0xff]
    %v156 = vld [vmem:[%s0 + $0x3f0] sm:$0xff]
    %v157 = vld [vmem:[%s0 + $0x3f8] sm:$0xff]
    %v158 = vpack.c.bf16 %v31, %v30
    %v159 = vpack.c.bf16 %v33, %v32
    %v160 = vpack.c.bf16 %v35, %v34
    %v161 = vpack.c.bf16 %v37, %v36
    %v162 = vpack.c.bf16 %v39, %v38
    %v163 = vpack.c.bf16 %v41, %v40
    %v164 = vpack.c.bf16 %v43, %v42
    %v165 = vpack.c.bf16 %v45, %v44
    %v166 = vpack.c.bf16 %v47, %v46
    %v167 = vpack.c.bf16 %v49, %v48
    %v168 = vpack.c.bf16 %v51, %v50
    %v169 = vpack.c.bf16 %v53, %v52
    %v170 = vpack.c.bf16 %v55, %v54
    %v171 = vpack.c.bf16 %v57, %v56
    %v172 = vpack.c.bf16 %v59, %v58
    %v173 = vpack.c.bf16 %v61, %v60
    %v174 = vpack.c.bf16 %v63, %v62
    %v175 = vpack.c.bf16 %v65, %v64
    %v176 = vpack.c.bf16 %v67, %v66
    %v177 = vpack.c.bf16 %v69, %v68
    %v178 = vpack.c.bf16 %v71, %v70
    %v179 = vpack.c.bf16 %v73, %v72
    %v180 = vpack.c.bf16 %v75, %v74
    %v181 = vpack.c.bf16 %v77, %v76
    %v182 = vpack.c.bf16 %v79, %v78
    %v183 = vpack.c.bf16 %v81, %v80
    %v184 = vpack.c.bf16 %v83, %v82
    %v185 = vpack.c.bf16 %v85, %v84
    %v186 = vpack.c.bf16 %v87, %v86
    %v187 = vpack.c.bf16 %v89, %v88
    %v188 = vpack.c.bf16 %v91, %v90
    %v189 = vpack.c.bf16 %v93, %v92
    %v190 = vpack.c.bf16 %v95, %v94
    %v191 = vpack.c.bf16 %v97, %v96
    %v192 = vpack.c.bf16 %v99, %v98
    %v193 = vpack.c.bf16 %v101, %v100
    %v194 = vpack.c.bf16 %v103, %v102
    %v195 = vpack.c.bf16 %v105, %v104
    %v196 = vpack.c.bf16 %v107, %v106
    %v197 = vpack.c.bf16 %v109, %v108
    %v198 = vpack.c.bf16 %v111, %v110
    %v199 = vpack.c.bf16 %v113, %v112
    %v200 = vpack.c.bf16 %v115, %v114
    %v201 = vpack.c.bf16 %v117, %v116
    %v202 = vpack.c.bf16 %v119, %v118
    %v203 = vpack.c.bf16 %v121, %v120
    %v204 = vpack.c.bf16 %v123, %v122
    %v205 = vpack.c.bf16 %v125, %v124
    %v206 = vpack.c.bf16 %v127, %v126
    %v207 = vpack.c.bf16 %v129, %v128
    %v208 = vpack.c.bf16 %v131, %v130
    %v209 = vpack.c.bf16 %v133, %v132
    %v210 = vpack.c.bf16 %v135, %v134
    %v211 = vpack.c.bf16 %v137, %v136
    %v212 = vpack.c.bf16 %v139, %v138
    %v213 = vpack.c.bf16 %v141, %v140
    %v214 = vpack.c.bf16 %v143, %v142
    %v215 = vpack.c.bf16 %v145, %v144
    %v216 = vpack.c.bf16 %v147, %v146
    %v217 = vpack.c.bf16 %v149, %v148
    %v218 = vpack.c.bf16 %v151, %v150
    %v219 = vpack.c.bf16 %v153, %v152
    %v220 = vpack.c.bf16 %v155, %v154
    %v221 = vpack.c.bf16 %v157, %v156
    %v222 = vld [vmem:[%s1] sm:$0xf]
    %v223 = vld [vmem:[%s1 + $0x4] sm:$0xf]
    %v224 = vld [vmem:[%s1 + $0x8] sm:$0xf]
    %v225 = vld [vmem:[%s1 + $0xc] sm:$0xf]
    %v226 = vld [vmem:[%s1 + $0x10] sm:$0xf]
    %v227 = vld [vmem:[%s1 + $0x14] sm:$0xf]
    %v228 = vld [vmem:[%s1 + $0x18] sm:$0xf]
    %v229 = vld [vmem:[%s1 + $0x1c] sm:$0xf]
    %v230 = vld [vmem:[%s1 + $0x20] sm:$0xf]
    %v231 = vld [vmem:[%s1 + $0x24] sm:$0xf]
    %v232 = vld [vmem:[%s1 + $0x28] sm:$0xf]
    %v233 = vld [vmem:[%s1 + $0x2c] sm:$0xf]
    %v234 = vld [vmem:[%s1 + $0x30] sm:$0xf]
    %v235 = vld [vmem:[%s1 + $0x34] sm:$0xf]
    %v236 = vld [vmem:[%s1 + $0x38] sm:$0xf]
    %v237 = vld [vmem:[%s1 + $0x3c] sm:$0xf]
    %v238 = vld [vmem:[%s2] sm:$0xff]
    %v239 = vld [vmem:[%s2 + $0x8] sm:$0xff]
    %v240 = vld [vmem:[%s2 + $0x10] sm:$0xff]
    %v241 = vld [vmem:[%s2 + $0x18] sm:$0xff]
    %v242 = vld [vmem:[%s2 + $0x20] sm:$0xff]
    %v243 = vld [vmem:[%s2 + $0x28] sm:$0xff]
    %v244 = vld [vmem:[%s2 + $0x30] sm:$0xff]
    %v245 = vld [vmem:[%s2 + $0x38] sm:$0xff]
    %v246 = vld [vmem:[%s2 + $0x40] sm:$0xff]
    %v247 = vld [vmem:[%s2 + $0x48] sm:$0xff]
    %v248 = vld [vmem:[%s2 + $0x50] sm:$0xff]
    %v249 = vld [vmem:[%s2 + $0x58] sm:$0xff]
    %v250 = vld [vmem:[%s2 + $0x60] sm:$0xff]
    %v251 = vld [vmem:[%s2 + $0x68] sm:$0xff]
    %v252 = vld [vmem:[%s2 + $0x70] sm:$0xff]
    %v253 = vld [vmem:[%s2 + $0x78] sm:$0xff]
    %255 = vset.pattern.permute.xlu0 0
    %256 = vperm.xlu0 %255, %v238
    %v257 = vpop.permute.xlu0 %256
    %260 = vset.pattern.permute.xlu0 0
    %261 = vperm.xlu0 %260, %v239
    %v262 = vpop.permute.xlu0 %261
    %265 = vset.pattern.permute.xlu0 0
    %266 = vperm.xlu0 %265, %v240
    %v267 = vpop.permute.xlu0 %266
    %270 = vset.pattern.permute.xlu0 0
    %271 = vperm.xlu0 %270, %v241
    %v272 = vpop.permute.xlu0 %271
    %275 = vset.pattern.permute.xlu0 0
    %276 = vperm.xlu0 %275, %v242
    %v277 = vpop.permute.xlu0 %276
    %280 = vset.pattern.permute.xlu0 0
    %281 = vperm.xlu0 %280, %v243
    %v282 = vpop.permute.xlu0 %281
    %285 = vset.pattern.permute.xlu0 0
    %286 = vperm.xlu0 %285, %v244
    %v287 = vpop.permute.xlu0 %286
    %290 = vset.pattern.permute.xlu0 0
    %291 = vperm.xlu0 %290, %v245
    %v292 = vpop.permute.xlu0 %291
    %295 = vset.pattern.permute.xlu0 0
    %296 = vperm.xlu0 %295, %v246
    %v297 = vpop.permute.xlu0 %296
    %300 = vset.pattern.permute.xlu0 0
    %301 = vperm.xlu0 %300, %v247
    %v302 = vpop.permute.xlu0 %301
    %305 = vset.pattern.permute.xlu0 0
    %306 = vperm.xlu0 %305, %v248
    %v307 = vpop.permute.xlu0 %306
    %310 = vset.pattern.permute.xlu0 0
    %311 = vperm.xlu0 %310, %v249
    %v312 = vpop.permute.xlu0 %311
    %315 = vset.pattern.permute.xlu0 0
    %316 = vperm.xlu0 %315, %v250
    %v317 = vpop.permute.xlu0 %316
    %320 = vset.pattern.permute.xlu0 0
    %321 = vperm.xlu0 %320, %v251
    %v322 = vpop.permute.xlu0 %321
    %325 = vset.pattern.permute.xlu0 0
    %326 = vperm.xlu0 %325, %v252
    %v327 = vpop.permute.xlu0 %326
    %330 = vset.pattern.permute.xlu0 0
    %331 = vperm.xlu0 %330, %v253
    %v332 = vpop.permute.xlu0 %331
    %v350 = vunpack.c.l.b16 %v222
    %v351 = vunpack.c.l.b16 %v223
    %v352 = vunpack.c.l.b16 %v224
    %v353 = vunpack.c.l.b16 %v225
    %v354 = vunpack.c.l.b16 %v226
    %v355 = vunpack.c.l.b16 %v227
    %v356 = vunpack.c.l.b16 %v228
    %v357 = vunpack.c.l.b16 %v229
    %v358 = vunpack.c.l.b16 %v230
    %v359 = vunpack.c.l.b16 %v231
    %v360 = vunpack.c.l.b16 %v232
    %v361 = vunpack.c.l.b16 %v233
    %v362 = vunpack.c.l.b16 %v234
    %v363 = vunpack.c.l.b16 %v235
    %v364 = vunpack.c.l.b16 %v236
    %v365 = vunpack.c.l.b16 %v237
    %v366 = vpack.c.b16 %v351, %v350
    %v367 = vpack.c.b16 %v353, %v352
    %v368 = vpack.c.b16 %v355, %v354
    %v369 = vpack.c.b16 %v357, %v356
    %v370 = vpack.c.b16 %v359, %v358
    %v371 = vpack.c.b16 %v361, %v360
    %v372 = vpack.c.b16 %v363, %v362
    %v373 = vpack.c.b16 %v365, %v364
    %vm374 = vcmask 31744
    %v376 = vsel %vm374, %v366, 0
    %v379 = vsel %vm374, %v367, 0
    %v382 = vsel %vm374, %v368, 0
    %v385 = vsel %vm374, %v369, 0
    %v388 = vsel %vm374, %v370, 0
    %v391 = vsel %vm374, %v371, 0
    %v394 = vsel %vm374, %v372, 0
    %v397 = vsel %vm374, %v373, 0
    %v400 = vsel %vm374, %v158, 0
    %v403 = vsel %vm374, %v159, 0
    %v406 = vsel %vm374, %v160, 0
    %v409 = vsel %vm374, %v161, 0
    %v412 = vsel %vm374, %v162, 0
    %v415 = vsel %vm374, %v163, 0
    %v418 = vsel %vm374, %v164, 0
    %v421 = vsel %vm374, %v165, 0
    %v424 = vsel %vm374, %v166, 0
    %v427 = vsel %vm374, %v167, 0
    %v430 = vsel %vm374, %v168, 0
    %v433 = vsel %vm374, %v169, 0
    %v436 = vsel %vm374, %v170, 0
    %v439 = vsel %vm374, %v171, 0
    %v442 = vsel %vm374, %v172, 0
    %v445 = vsel %vm374, %v173, 0
    %v448 = vsel %vm374, %v174, 0
    %v451 = vsel %vm374, %v175, 0
    %v454 = vsel %vm374, %v176, 0
    %v457 = vsel %vm374, %v177, 0
    %v460 = vsel %vm374, %v178, 0
    %v463 = vsel %vm374, %v179, 0
    %v466 = vsel %vm374, %v180, 0
    %v469 = vsel %vm374, %v181, 0
    %v472 = vsel %vm374, %v182, 0
    %v475 = vsel %vm374, %v183, 0
    %v478 = vsel %vm374, %v184, 0
    %v481 = vsel %vm374, %v185, 0
    %v484 = vsel %vm374, %v186, 0
    %v487 = vsel %vm374, %v187, 0
    %v490 = vsel %vm374, %v188, 0
    %v493 = vsel %vm374, %v189, 0
    %v496 = vsel %vm374, %v190, 0
    %v499 = vsel %vm374, %v191, 0
    %v502 = vsel %vm374, %v192, 0
    %v505 = vsel %vm374, %v193, 0
    %v508 = vsel %vm374, %v194, 0
    %v511 = vsel %vm374, %v195, 0
    %v514 = vsel %vm374, %v196, 0
    %v517 = vsel %vm374, %v197, 0
    %v520 = vsel %vm374, %v198, 0
    %v523 = vsel %vm374, %v199, 0
    %v526 = vsel %vm374, %v200, 0
    %v529 = vsel %vm374, %v201, 0
    %v532 = vsel %vm374, %v202, 0
    %v535 = vsel %vm374, %v203, 0
    %v538 = vsel %vm374, %v204, 0
    %v541 = vsel %vm374, %v205, 0
    %v544 = vsel %vm374, %v206, 0
    %v547 = vsel %vm374, %v207, 0
    %v550 = vsel %vm374, %v208, 0
    %v553 = vsel %vm374, %v209, 0
    %v556 = vsel %vm374, %v210, 0
    %v559 = vsel %vm374, %v211, 0
    %v562 = vsel %vm374, %v212, 0
    %v565 = vsel %vm374, %v213, 0
    %v568 = vsel %vm374, %v214, 0
    %v571 = vsel %vm374, %v215, 0
    %v574 = vsel %vm374, %v216, 0
    %v577 = vsel %vm374, %v217, 0
    %v580 = vsel %vm374, %v218, 0
    %v583 = vsel %vm374, %v219, 0
    %v586 = vsel %vm374, %v220, 0
    %v589 = vsel %vm374, %v221, 0
    %591 = vmatpush.bf16.xpose.msra.mxu0 %v421
    %592 = vmatpush.bf16.xpose.msra.mxu0 %v418
    %593 = vmatpush.bf16.xpose.msra.mxu0 %v415
    %594 = vmatpush.bf16.xpose.msra.mxu0 %v412
    %595 = vmatpush.bf16.xpose.msra.mxu0 %v409
    %596 = vmatpush.bf16.xpose.msra.mxu0 %v406
    %597 = vmatpush.bf16.xpose.msra.mxu0 %v403
    %598 = vmatpush.bf16.xpose.msra.mxu0 %v400
    %599 = vmatmul.bf16.gmra.mxu0 %v376
    %v600 = vpop.f32.mrf.mxu0
    %v601 = vadd.f32 %v257, %v600
    %v602 = vpop.f32.mrf.mxu0
    %v603 = vadd.f32 %v262, %v602
    %604 = vmatmul.bf16.gmra.mxu0 %v379
    %v605 = vpop.f32.mrf.mxu0
    %v606 = vadd.f32 %v267, %v605
    %v607 = vpop.f32.mrf.mxu0
    %v608 = vadd.f32 %v272, %v607
    %609 = vmatmul.bf16.gmra.mxu0 %v382
    %v610 = vpop.f32.mrf.mxu0
    %v611 = vadd.f32 %v277, %v610
    %v612 = vpop.f32.mrf.mxu0
    %v613 = vadd.f32 %v282, %v612
    %614 = vmatmul.bf16.gmra.mxu0 %v385
    %v615 = vpop.f32.mrf.mxu0
    %v616 = vadd.f32 %v287, %v615
    %v617 = vpop.f32.mrf.mxu0
    %v618 = vadd.f32 %v292, %v617
    %619 = vmatmul.bf16.gmra.mxu0 %v388
    %v620 = vpop.f32.mrf.mxu0
    %v621 = vadd.f32 %v297, %v620
    %v622 = vpop.f32.mrf.mxu0
    %v623 = vadd.f32 %v302, %v622
    %624 = vmatmul.bf16.gmra.mxu0 %v391
    %v625 = vpop.f32.mrf.mxu0
    %v626 = vadd.f32 %v307, %v625
    %v627 = vpop.f32.mrf.mxu0
    %v628 = vadd.f32 %v312, %v627
    %629 = vmatmul.bf16.gmra.mxu0 %v394
    %v630 = vpop.f32.mrf.mxu0
    %v631 = vadd.f32 %v317, %v630
    %v632 = vpop.f32.mrf.mxu0
    %v633 = vadd.f32 %v322, %v632
    %634 = vmatmul.bf16.gmra.mxu0 %v397
    %v635 = vpop.f32.mrf.mxu0
    %v636 = vadd.f32 %v327, %v635
    %v637 = vpop.f32.mrf.mxu0
    %v638 = vadd.f32 %v332, %v637
    %639 = vdwg.mxu0
    %640 = vmatpush.bf16.xpose.msra.mxu0 %v445
    %641 = vmatpush.bf16.xpose.msra.mxu0 %v442
    %642 = vmatpush.bf16.xpose.msra.mxu0 %v439
    %643 = vmatpush.bf16.xpose.msra.mxu0 %v436
    %644 = vmatpush.bf16.xpose.msra.mxu0 %v433
    %645 = vmatpush.bf16.xpose.msra.mxu0 %v430
    %646 = vmatpush.bf16.xpose.msra.mxu0 %v427
    %647 = vmatpush.bf16.xpose.msra.mxu0 %v424
    %648 = vmatmul.bf16.gmra.mxu0 %v376
    %v649 = vpop.f32.mrf.mxu0
    %v650 = vadd.f32 %v257, %v649
    %v651 = vpop.f32.mrf.mxu0
    %v652 = vadd.f32 %v262, %v651
    %653 = vmatmul.bf16.gmra.mxu0 %v379
    %v654 = vpop.f32.mrf.mxu0
    %v655 = vadd.f32 %v267, %v654
    %v656 = vpop.f32.mrf.mxu0
    %v657 = vadd.f32 %v272, %v656
    %658 = vmatmul.bf16.gmra.mxu0 %v382
    %v659 = vpop.f32.mrf.mxu0
    %v660 = vadd.f32 %v277, %v659
    %v661 = vpop.f32.mrf.mxu0
    %v662 = vadd.f32 %v282, %v661
    %663 = vmatmul.bf16.gmra.mxu0 %v385
    %v664 = vpop.f32.mrf.mxu0
    %v665 = vadd.f32 %v287, %v664
    %v666 = vpop.f32.mrf.mxu0
    %v667 = vadd.f32 %v292, %v666
    %668 = vmatmul.bf16.gmra.mxu0 %v388
    %v669 = vpop.f32.mrf.mxu0
    %v670 = vadd.f32 %v297, %v669
    %v671 = vpop.f32.mrf.mxu0
    %v672 = vadd.f32 %v302, %v671
    %673 = vmatmul.bf16.gmra.mxu0 %v391
    %v674 = vpop.f32.mrf.mxu0
    %v675 = vadd.f32 %v307, %v674
    %v676 = vpop.f32.mrf.mxu0
    %v677 = vadd.f32 %v312, %v676
    %678 = vmatmul.bf16.gmra.mxu0 %v394
    %v679 = vpop.f32.mrf.mxu0
    %v680 = vadd.f32 %v317, %v679
    %v681 = vpop.f32.mrf.mxu0
    %v682 = vadd.f32 %v322, %v681
    %683 = vmatmul.bf16.gmra.mxu0 %v397
    %v684 = vpop.f32.mrf.mxu0
    %v685 = vadd.f32 %v327, %v684
    %v686 = vpop.f32.mrf.mxu0
    %v687 = vadd.f32 %v332, %v686
    %688 = vdwg.mxu0
    %689 = vmatpush.bf16.xpose.msra.mxu0 %v469
    %690 = vmatpush.bf16.xpose.msra.mxu0 %v466
    %691 = vmatpush.bf16.xpose.msra.mxu0 %v463
    %692 = vmatpush.bf16.xpose.msra.mxu0 %v460
    %693 = vmatpush.bf16.xpose.msra.mxu0 %v457
    %694 = vmatpush.bf16.xpose.msra.mxu0 %v454
    %695 = vmatpush.bf16.xpose.msra.mxu0 %v451
    %696 = vmatpush.bf16.xpose.msra.mxu0 %v448
    %697 = vmatmul.bf16.gmra.mxu0 %v376
    %v698 = vpop.f32.mrf.mxu0
    %v699 = vadd.f32 %v257, %v698
    %v700 = vpop.f32.mrf.mxu0
    %v701 = vadd.f32 %v262, %v700
    %702 = vmatmul.bf16.gmra.mxu0 %v379
    %v703 = vpop.f32.mrf.mxu0
    %v704 = vadd.f32 %v267, %v703
    %v705 = vpop.f32.mrf.mxu0
    %v706 = vadd.f32 %v272, %v705
    %707 = vmatmul.bf16.gmra.mxu0 %v382
    %v708 = vpop.f32.mrf.mxu0
    %v709 = vadd.f32 %v277, %v708
    %v710 = vpop.f32.mrf.mxu0
    %v711 = vadd.f32 %v282, %v710
    %712 = vmatmul.bf16.gmra.mxu0 %v385
    %v713 = vpop.f32.mrf.mxu0
    %v714 = vadd.f32 %v287, %v713
    %v715 = vpop.f32.mrf.mxu0
    %v716 = vadd.f32 %v292, %v715
    %717 = vmatmul.bf16.gmra.mxu0 %v388
    %v718 = vpop.f32.mrf.mxu0
    %v719 = vadd.f32 %v297, %v718
    %v720 = vpop.f32.mrf.mxu0
    %v721 = vadd.f32 %v302, %v720
    %722 = vmatmul.bf16.gmra.mxu0 %v391
    %v723 = vpop.f32.mrf.mxu0
    %v724 = vadd.f32 %v307, %v723
    %v725 = vpop.f32.mrf.mxu0
    %v726 = vadd.f32 %v312, %v725
    %727 = vmatmul.bf16.gmra.mxu0 %v394
    %v728 = vpop.f32.mrf.mxu0
    %v729 = vadd.f32 %v317, %v728
    %v730 = vpop.f32.mrf.mxu0
    %v731 = vadd.f32 %v322, %v730
    %732 = vmatmul.bf16.gmra.mxu0 %v397
    %v733 = vpop.f32.mrf.mxu0
    %v734 = vadd.f32 %v327, %v733
    %v735 = vpop.f32.mrf.mxu0
    %v736 = vadd.f32 %v332, %v735
    %737 = vdwg.mxu0
    %738 = vmatpush.bf16.xpose.msra.mxu0 %v493
    %739 = vmatpush.bf16.xpose.msra.mxu0 %v490
    %740 = vmatpush.bf16.xpose.msra.mxu0 %v487
    %741 = vmatpush.bf16.xpose.msra.mxu0 %v484
    %742 = vmatpush.bf16.xpose.msra.mxu0 %v481
    %743 = vmatpush.bf16.xpose.msra.mxu0 %v478
    %744 = vmatpush.bf16.xpose.msra.mxu0 %v475
    %745 = vmatpush.bf16.xpose.msra.mxu0 %v472
    %746 = vmatmul.bf16.gmra.mxu0 %v376
    %v747 = vpop.f32.mrf.mxu0
    %v748 = vadd.f32 %v257, %v747
    %v749 = vpop.f32.mrf.mxu0
    %v750 = vadd.f32 %v262, %v749
    %751 = vmatmul.bf16.gmra.mxu0 %v379
    %v752 = vpop.f32.mrf.mxu0
    %v753 = vadd.f32 %v267, %v752
    %v754 = vpop.f32.mrf.mxu0
    %v755 = vadd.f32 %v272, %v754
    %756 = vmatmul.bf16.gmra.mxu0 %v382
    %v757 = vpop.f32.mrf.mxu0
    %v758 = vadd.f32 %v277, %v757
    %v759 = vpop.f32.mrf.mxu0
    %v760 = vadd.f32 %v282, %v759
    %761 = vmatmul.bf16.gmra.mxu0 %v385
    %v762 = vpop.f32.mrf.mxu0
    %v763 = vadd.f32 %v287, %v762
    %v764 = vpop.f32.mrf.mxu0
    %v765 = vadd.f32 %v292, %v764
    %766 = vmatmul.bf16.gmra.mxu0 %v388
    %v767 = vpop.f32.mrf.mxu0
    %v768 = vadd.f32 %v297, %v767
    %v769 = vpop.f32.mrf.mxu0
    %v770 = vadd.f32 %v302, %v769
    %771 = vmatmul.bf16.gmra.mxu0 %v391
    %v772 = vpop.f32.mrf.mxu0
    %v773 = vadd.f32 %v307, %v772
    %v774 = vpop.f32.mrf.mxu0
    %v775 = vadd.f32 %v312, %v774
    %776 = vmatmul.bf16.gmra.mxu0 %v394
    %v777 = vpop.f32.mrf.mxu0
    %v778 = vadd.f32 %v317, %v777
    %v779 = vpop.f32.mrf.mxu0
    %v780 = vadd.f32 %v322, %v779
    %781 = vmatmul.bf16.gmra.mxu0 %v397
    %v782 = vpop.f32.mrf.mxu0
    %v783 = vadd.f32 %v327, %v782
    %v784 = vpop.f32.mrf.mxu0
    %v785 = vadd.f32 %v332, %v784
    %786 = vdwg.mxu0
    %787 = vmatpush.bf16.xpose.msra.mxu0 %v517
    %788 = vmatpush.bf16.xpose.msra.mxu0 %v514
    %789 = vmatpush.bf16.xpose.msra.mxu0 %v511
    %790 = vmatpush.bf16.xpose.msra.mxu0 %v508
    %791 = vmatpush.bf16.xpose.msra.mxu0 %v505
    %792 = vmatpush.bf16.xpose.msra.mxu0 %v502
    %793 = vmatpush.bf16.xpose.msra.mxu0 %v499
    %794 = vmatpush.bf16.xpose.msra.mxu0 %v496
    %795 = vmatmul.bf16.gmra.mxu0 %v376
    %v796 = vpop.f32.mrf.mxu0
    %v797 = vadd.f32 %v257, %v796
    %v798 = vpop.f32.mrf.mxu0
    %v799 = vadd.f32 %v262, %v798
    %800 = vmatmul.bf16.gmra.mxu0 %v379
    %v801 = vpop.f32.mrf.mxu0
    %v802 = vadd.f32 %v267, %v801
    %v803 = vpop.f32.mrf.mxu0
    %v804 = vadd.f32 %v272, %v803
    %805 = vmatmul.bf16.gmra.mxu0 %v382
    %v806 = vpop.f32.mrf.mxu0
    %v807 = vadd.f32 %v277, %v806
    %v808 = vpop.f32.mrf.mxu0
    %v809 = vadd.f32 %v282, %v808
    %810 = vmatmul.bf16.gmra.mxu0 %v385
    %v811 = vpop.f32.mrf.mxu0
    %v812 = vadd.f32 %v287, %v811
    %v813 = vpop.f32.mrf.mxu0
    %v814 = vadd.f32 %v292, %v813
    %815 = vmatmul.bf16.gmra.mxu0 %v388
    %v816 = vpop.f32.mrf.mxu0
    %v817 = vadd.f32 %v297, %v816
    %v818 = vpop.f32.mrf.mxu0
    %v819 = vadd.f32 %v302, %v818
    %820 = vmatmul.bf16.gmra.mxu0 %v391
    %v821 = vpop.f32.mrf.mxu0
    %v822 = vadd.f32 %v307, %v821
    %v823 = vpop.f32.mrf.mxu0
    %v824 = vadd.f32 %v312, %v823
    %825 = vmatmul.bf16.gmra.mxu0 %v394
    %v826 = vpop.f32.mrf.mxu0
    %v827 = vadd.f32 %v317, %v826
    %v828 = vpop.f32.mrf.mxu0
    %v829 = vadd.f32 %v322, %v828
    %830 = vmatmul.bf16.gmra.mxu0 %v397
    %v831 = vpop.f32.mrf.mxu0
    %v832 = vadd.f32 %v327, %v831
    %v833 = vpop.f32.mrf.mxu0
    %v834 = vadd.f32 %v332, %v833
    %835 = vdwg.mxu0
    %836 = vmatpush.bf16.xpose.msra.mxu0 %v541
    %837 = vmatpush.bf16.xpose.msra.mxu0 %v538
    %838 = vmatpush.bf16.xpose.msra.mxu0 %v535
    %839 = vmatpush.bf16.xpose.msra.mxu0 %v532
    %840 = vmatpush.bf16.xpose.msra.mxu0 %v529
    %841 = vmatpush.bf16.xpose.msra.mxu0 %v526
    %842 = vmatpush.bf16.xpose.msra.mxu0 %v523
    %843 = vmatpush.bf16.xpose.msra.mxu0 %v520
    %844 = vmatmul.bf16.gmra.mxu0 %v376
    %v845 = vpop.f32.mrf.mxu0
    %v846 = vadd.f32 %v257, %v845
    %v847 = vpop.f32.mrf.mxu0
    %v848 = vadd.f32 %v262, %v847
    %849 = vmatmul.bf16.gmra.mxu0 %v379
    %v850 = vpop.f32.mrf.mxu0
    %v851 = vadd.f32 %v267, %v850
    %v852 = vpop.f32.mrf.mxu0
    %v853 = vadd.f32 %v272, %v852
    %854 = vmatmul.bf16.gmra.mxu0 %v382
    %v855 = vpop.f32.mrf.mxu0
    %v856 = vadd.f32 %v277, %v855
    %v857 = vpop.f32.mrf.mxu0
    %v858 = vadd.f32 %v282, %v857
    %859 = vmatmul.bf16.gmra.mxu0 %v385
    %v860 = vpop.f32.mrf.mxu0
    %v861 = vadd.f32 %v287, %v860
    %v862 = vpop.f32.mrf.mxu0
    %v863 = vadd.f32 %v292, %v862
    %864 = vmatmul.bf16.gmra.mxu0 %v388
    %v865 = vpop.f32.mrf.mxu0
    %v866 = vadd.f32 %v297, %v865
    %v867 = vpop.f32.mrf.mxu0
    %v868 = vadd.f32 %v302, %v867
    %869 = vmatmul.bf16.gmra.mxu0 %v391
    %v870 = vpop.f32.mrf.mxu0
    %v871 = vadd.f32 %v307, %v870
    %v872 = vpop.f32.mrf.mxu0
    %v873 = vadd.f32 %v312, %v872
    %874 = vmatmul.bf16.gmra.mxu0 %v394
    %v875 = vpop.f32.mrf.mxu0
    %v876 = vadd.f32 %v317, %v875
    %v877 = vpop.f32.mrf.mxu0
    %v878 = vadd.f32 %v322, %v877
    %879 = vmatmul.bf16.gmra.mxu0 %v397
    %v880 = vpop.f32.mrf.mxu0
    %v881 = vadd.f32 %v327, %v880
    %v882 = vpop.f32.mrf.mxu0
    %v883 = vadd.f32 %v332, %v882
    %884 = vdwg.mxu0
    %885 = vmatpush.bf16.xpose.msra.mxu0 %v565
    %886 = vmatpush.bf16.xpose.msra.mxu0 %v562
    %887 = vmatpush.bf16.xpose.msra.mxu0 %v559
    %888 = vmatpush.bf16.xpose.msra.mxu0 %v556
    %889 = vmatpush.bf16.xpose.msra.mxu0 %v553
    %890 = vmatpush.bf16.xpose.msra.mxu0 %v550
    %891 = vmatpush.bf16.xpose.msra.mxu0 %v547
    %892 = vmatpush.bf16.xpose.msra.mxu0 %v544
    %893 = vmatmul.bf16.gmra.mxu0 %v376
    %v894 = vpop.f32.mrf.mxu0
    %v895 = vadd.f32 %v257, %v894
    %v896 = vpop.f32.mrf.mxu0
    %v897 = vadd.f32 %v262, %v896
    %898 = vmatmul.bf16.gmra.mxu0 %v379
    %v899 = vpop.f32.mrf.mxu0
    %v900 = vadd.f32 %v267, %v899
    %v901 = vpop.f32.mrf.mxu0
    %v902 = vadd.f32 %v272, %v901
    %903 = vmatmul.bf16.gmra.mxu0 %v382
    %v904 = vpop.f32.mrf.mxu0
    %v905 = vadd.f32 %v277, %v904
    %v906 = vpop.f32.mrf.mxu0
    %v907 = vadd.f32 %v282, %v906
    %908 = vmatmul.bf16.gmra.mxu0 %v385
    %v909 = vpop.f32.mrf.mxu0
    %v910 = vadd.f32 %v287, %v909
    %v911 = vpop.f32.mrf.mxu0
    %v912 = vadd.f32 %v292, %v911
    %913 = vmatmul.bf16.gmra.mxu0 %v388
    %v914 = vpop.f32.mrf.mxu0
    %v915 = vadd.f32 %v297, %v914
    %v916 = vpop.f32.mrf.mxu0
    %v917 = vadd.f32 %v302, %v916
    %918 = vmatmul.bf16.gmra.mxu0 %v391
    %v919 = vpop.f32.mrf.mxu0
    %v920 = vadd.f32 %v307, %v919
    %v921 = vpop.f32.mrf.mxu0
    %v922 = vadd.f32 %v312, %v921
    %923 = vmatmul.bf16.gmra.mxu0 %v394
    %v924 = vpop.f32.mrf.mxu0
    %v925 = vadd.f32 %v317, %v924
    %v926 = vpop.f32.mrf.mxu0
    %v927 = vadd.f32 %v322, %v926
    %928 = vmatmul.bf16.gmra.mxu0 %v397
    %v929 = vpop.f32.mrf.mxu0
    %v930 = vadd.f32 %v327, %v929
    %v931 = vpop.f32.mrf.mxu0
    %v932 = vadd.f32 %v332, %v931
    %933 = vdwg.mxu0
    %934 = vmatpush.bf16.xpose.msra.mxu0 %v589
    %935 = vmatpush.bf16.xpose.msra.mxu0 %v586
    %936 = vmatpush.bf16.xpose.msra.mxu0 %v583
    %937 = vmatpush.bf16.xpose.msra.mxu0 %v580
    %938 = vmatpush.bf16.xpose.msra.mxu0 %v577
    %939 = vmatpush.bf16.xpose.msra.mxu0 %v574
    %940 = vmatpush.bf16.xpose.msra.mxu0 %v571
    %941 = vmatpush.bf16.xpose.msra.mxu0 %v568
    %942 = vmatmul.bf16.gmra.mxu0 %v376
    %v943 = vpop.f32.mrf.mxu0
    %v944 = vadd.f32 %v257, %v943
    %v945 = vpop.f32.mrf.mxu0
    %v946 = vadd.f32 %v262, %v945
    %947 = vmatmul.bf16.gmra.mxu0 %v379
    %v948 = vpop.f32.mrf.mxu0
    %v949 = vadd.f32 %v267, %v948
    %v950 = vpop.f32.mrf.mxu0
    %v951 = vadd.f32 %v272, %v950
    %952 = vmatmul.bf16.gmra.mxu0 %v382
    %v953 = vpop.f32.mrf.mxu0
    %v954 = vadd.f32 %v277, %v953
    %v955 = vpop.f32.mrf.mxu0
    %v956 = vadd.f32 %v282, %v955
    %957 = vmatmul.bf16.gmra.mxu0 %v385
    %v958 = vpop.f32.mrf.mxu0
    %v959 = vadd.f32 %v287, %v958
    %v960 = vpop.f32.mrf.mxu0
    %v961 = vadd.f32 %v292, %v960
    %962 = vmatmul.bf16.gmra.mxu0 %v388
    %v963 = vpop.f32.mrf.mxu0
    %v964 = vadd.f32 %v297, %v963
    %v965 = vpop.f32.mrf.mxu0
    %v966 = vadd.f32 %v302, %v965
    %967 = vmatmul.bf16.gmra.mxu0 %v391
    %v968 = vpop.f32.mrf.mxu0
    %v969 = vadd.f32 %v307, %v968
    %v970 = vpop.f32.mrf.mxu0
    %v971 = vadd.f32 %v312, %v970
    %972 = vmatmul.bf16.gmra.mxu0 %v394
    %v973 = vpop.f32.mrf.mxu0
    %v974 = vadd.f32 %v317, %v973
    %v975 = vpop.f32.mrf.mxu0
    %v976 = vadd.f32 %v322, %v975
    %977 = vmatmul.bf16.gmra.mxu0 %v397
    %v978 = vpop.f32.mrf.mxu0
    %v979 = vadd.f32 %v327, %v978
    %v980 = vpop.f32.mrf.mxu0
    %v981 = vadd.f32 %v332, %v980
    %982 = vdwg.mxu0
    %v983 = vmax.f32 %v601, 0.0
    %v984 = vmax.f32 %v650, 0.0
    %v985 = vmax.f32 %v699, 0.0
    %v986 = vmax.f32 %v748, 0.0
    %v987 = vmax.f32 %v797, 0.0
    %v988 = vmax.f32 %v846, 0.0
    %v989 = vmax.f32 %v895, 0.0
    %v990 = vmax.f32 %v944, 0.0
    %v991 = vmax.f32 %v603, 0.0
    %v992 = vmax.f32 %v652, 0.0
    %v993 = vmax.f32 %v701, 0.0
    %v994 = vmax.f32 %v750, 0.0
    %v995 = vmax.f32 %v799, 0.0
    %v996 = vmax.f32 %v848, 0.0
    %v997 = vmax.f32 %v897, 0.0
    %v998 = vmax.f32 %v946, 0.0
    %v999 = vmax.f32 %v606, 0.0
    %v1000 = vmax.f32 %v655, 0.0
    %v1001 = vmax.f32 %v704, 0.0
    %v1002 = vmax.f32 %v753, 0.0
    %v1003 = vmax.f32 %v802, 0.0
    %v1004 = vmax.f32 %v851, 0.0
    %v1005 = vmax.f32 %v900, 0.0
    %v1006 = vmax.f32 %v949, 0.0
    %v1007 = vmax.f32 %v608, 0.0
    %v1008 = vmax.f32 %v657, 0.0
    %v1009 = vmax.f32 %v706, 0.0
    %v1010 = vmax.f32 %v755, 0.0
    %v1011 = vmax.f32 %v804, 0.0
    %v1012 = vmax.f32 %v853, 0.0
    %v1013 = vmax.f32 %v902, 0.0
    %v1014 = vmax.f32 %v951, 0.0
    %v1015 = vmax.f32 %v611, 0.0
    %v1016 = vmax.f32 %v660, 0.0
    %v1017 = vmax.f32 %v709, 0.0
    %v1018 = vmax.f32 %v758, 0.0
    %v1019 = vmax.f32 %v807, 0.0
    %v1020 = vmax.f32 %v856, 0.0
    %v1021 = vmax.f32 %v905, 0.0
    %v1022 = vmax.f32 %v954, 0.0
    %v1023 = vmax.f32 %v613, 0.0
    %v1024 = vmax.f32 %v662, 0.0
    %v1025 = vmax.f32 %v711, 0.0
    %v1026 = vmax.f32 %v760, 0.0
    %v1027 = vmax.f32 %v809, 0.0
    %v1028 = vmax.f32 %v858, 0.0
    %v1029 = vmax.f32 %v907, 0.0
    %v1030 = vmax.f32 %v956, 0.0
    %v1031 = vmax.f32 %v616, 0.0
    %v1032 = vmax.f32 %v665, 0.0
    %v1033 = vmax.f32 %v714, 0.0
    %v1034 = vmax.f32 %v763, 0.0
    %v1035 = vmax.f32 %v812, 0.0
    %v1036 = vmax.f32 %v861, 0.0
    %v1037 = vmax.f32 %v910, 0.0
    %v1038 = vmax.f32 %v959, 0.0
    %v1039 = vmax.f32 %v618, 0.0
    %v1040 = vmax.f32 %v667, 0.0
    %v1041 = vmax.f32 %v716, 0.0
    %v1042 = vmax.f32 %v765, 0.0
    %v1043 = vmax.f32 %v814, 0.0
    %v1044 = vmax.f32 %v863, 0.0
    %v1045 = vmax.f32 %v912, 0.0
    %v1046 = vmax.f32 %v961, 0.0
    %v1047 = vmax.f32 %v621, 0.0
    %v1048 = vmax.f32 %v670, 0.0
    %v1049 = vmax.f32 %v719, 0.0
    %v1050 = vmax.f32 %v768, 0.0
    %v1051 = vmax.f32 %v817, 0.0
    %v1052 = vmax.f32 %v866, 0.0
    %v1053 = vmax.f32 %v915, 0.0
    %v1054 = vmax.f32 %v964, 0.0
    %v1055 = vmax.f32 %v623, 0.0
    %v1056 = vmax.f32 %v672, 0.0
    %v1057 = vmax.f32 %v721, 0.0
    %v1058 = vmax.f32 %v770, 0.0
    %v1059 = vmax.f32 %v819, 0.0
    %v1060 = vmax.f32 %v868, 0.0
    %v1061 = vmax.f32 %v917, 0.0
    %v1062 = vmax.f32 %v966, 0.0
    %v1063 = vmax.f32 %v626, 0.0
    %v1064 = vmax.f32 %v675, 0.0
    %v1065 = vmax.f32 %v724, 0.0
    %v1066 = vmax.f32 %v773, 0.0
    %v1067 = vmax.f32 %v822, 0.0
    %v1068 = vmax.f32 %v871, 0.0
    %v1069 = vmax.f32 %v920, 0.0
    %v1070 = vmax.f32 %v969, 0.0
    %v1071 = vmax.f32 %v628, 0.0
    %v1072 = vmax.f32 %v677, 0.0
    %v1073 = vmax.f32 %v726, 0.0
    %v1074 = vmax.f32 %v775, 0.0
    %v1075 = vmax.f32 %v824, 0.0
    %v1076 = vmax.f32 %v873, 0.0
    %v1077 = vmax.f32 %v922, 0.0
    %v1078 = vmax.f32 %v971, 0.0
    %v1079 = vmax.f32 %v631, 0.0
    %v1080 = vmax.f32 %v680, 0.0
    %v1081 = vmax.f32 %v729, 0.0
    %v1082 = vmax.f32 %v778, 0.0
    %v1083 = vmax.f32 %v827, 0.0
    %v1084 = vmax.f32 %v876, 0.0
    %v1085 = vmax.f32 %v925, 0.0
    %v1086 = vmax.f32 %v974, 0.0
    %v1087 = vmax.f32 %v633, 0.0
    %v1088 = vmax.f32 %v682, 0.0
    %v1089 = vmax.f32 %v731, 0.0
    %v1090 = vmax.f32 %v780, 0.0
    %v1091 = vmax.f32 %v829, 0.0
    %v1092 = vmax.f32 %v878, 0.0
    %v1093 = vmax.f32 %v927, 0.0
    %v1094 = vmax.f32 %v976, 0.0
    %v1095 = vmax.f32 %v636, 0.0
    %v1096 = vmax.f32 %v685, 0.0
    %v1097 = vmax.f32 %v734, 0.0
    %v1098 = vmax.f32 %v783, 0.0
    %v1099 = vmax.f32 %v832, 0.0
    %v1100 = vmax.f32 %v881, 0.0
    %v1101 = vmax.f32 %v930, 0.0
    %v1102 = vmax.f32 %v979, 0.0
    %v1103 = vmax.f32 %v638, 0.0
    %v1104 = vmax.f32 %v687, 0.0
    %v1105 = vmax.f32 %v736, 0.0
    %v1106 = vmax.f32 %v785, 0.0
    %v1107 = vmax.f32 %v834, 0.0
    %v1108 = vmax.f32 %v883, 0.0
    %v1109 = vmax.f32 %v932, 0.0
    %v1110 = vmax.f32 %v981, 0.0
    %v1111 = vpack.c.bf16 %v991, %v983
    %v1112 = vpack.c.bf16 %v992, %v984
    %v1113 = vpack.c.bf16 %v993, %v985
    %v1114 = vpack.c.bf16 %v994, %v986
    %v1115 = vpack.c.bf16 %v995, %v987
    %v1116 = vpack.c.bf16 %v996, %v988
    %v1117 = vpack.c.bf16 %v997, %v989
    %v1118 = vpack.c.bf16 %v998, %v990
    %v1119 = vpack.c.bf16 %v1007, %v999
    %v1120 = vpack.c.bf16 %v1008, %v1000
    %v1121 = vpack.c.bf16 %v1009, %v1001
    %v1122 = vpack.c.bf16 %v1010, %v1002
    %v1123 = vpack.c.bf16 %v1011, %v1003
    %v1124 = vpack.c.bf16 %v1012, %v1004
    %v1125 = vpack.c.bf16 %v1013, %v1005
    %v1126 = vpack.c.bf16 %v1014, %v1006
    %v1127 = vpack.c.bf16 %v1023, %v1015
    %v1128 = vpack.c.bf16 %v1024, %v1016
    %v1129 = vpack.c.bf16 %v1025, %v1017
    %v1130 = vpack.c.bf16 %v1026, %v1018
    %v1131 = vpack.c.bf16 %v1027, %v1019
    %v1132 = vpack.c.bf16 %v1028, %v1020
    %v1133 = vpack.c.bf16 %v1029, %v1021
    %v1134 = vpack.c.bf16 %v1030, %v1022
    %v1135 = vpack.c.bf16 %v1039, %v1031
    %v1136 = vpack.c.bf16 %v1040, %v1032
    %v1137 = vpack.c.bf16 %v1041, %v1033
    %v1138 = vpack.c.bf16 %v1042, %v1034
    %v1139 = vpack.c.bf16 %v1043, %v1035
    %v1140 = vpack.c.bf16 %v1044, %v1036
    %v1141 = vpack.c.bf16 %v1045, %v1037
    %v1142 = vpack.c.bf16 %v1046, %v1038
    %v1143 = vpack.c.bf16 %v1055, %v1047
    %v1144 = vpack.c.bf16 %v1056, %v1048
    %v1145 = vpack.c.bf16 %v1057, %v1049
    %v1146 = vpack.c.bf16 %v1058, %v1050
    %v1147 = vpack.c.bf16 %v1059, %v1051
    %v1148 = vpack.c.bf16 %v1060, %v1052
    %v1149 = vpack.c.bf16 %v1061, %v1053
    %v1150 = vpack.c.bf16 %v1062, %v1054
    %v1151 = vpack.c.bf16 %v1071, %v1063
    %v1152 = vpack.c.bf16 %v1072, %v1064
    %v1153 = vpack.c.bf16 %v1073, %v1065
    %v1154 = vpack.c.bf16 %v1074, %v1066
    %v1155 = vpack.c.bf16 %v1075, %v1067
    %v1156 = vpack.c.bf16 %v1076, %v1068
    %v1157 = vpack.c.bf16 %v1077, %v1069
    %v1158 = vpack.c.bf16 %v1078, %v1070
    %v1159 = vpack.c.bf16 %v1087, %v1079
    %v1160 = vpack.c.bf16 %v1088, %v1080
    %v1161 = vpack.c.bf16 %v1089, %v1081
    %v1162 = vpack.c.bf16 %v1090, %v1082
    %v1163 = vpack.c.bf16 %v1091, %v1083
    %v1164 = vpack.c.bf16 %v1092, %v1084
    %v1165 = vpack.c.bf16 %v1093, %v1085
    %v1166 = vpack.c.bf16 %v1094, %v1086
    %v1167 = vpack.c.bf16 %v1103, %v1095
    %v1168 = vpack.c.bf16 %v1104, %v1096
    %v1169 = vpack.c.bf16 %v1105, %v1097
    %v1170 = vpack.c.bf16 %v1106, %v1098
    %v1171 = vpack.c.bf16 %v1107, %v1099
    %v1172 = vpack.c.bf16 %v1108, %v1100
    %v1173 = vpack.c.bf16 %v1109, %v1101
    %v1174 = vpack.c.bf16 %v1110, %v1102
    %v1175 = vld [vmem:[%s3] sm:$0xf]
    %v1176 = vld [vmem:[%s3 + $0x4] sm:$0xf]
    %v1177 = vld [vmem:[%s3 + $0x8] sm:$0xf]
    %v1178 = vld [vmem:[%s3 + $0xc] sm:$0xf]
    %v1179 = vld [vmem:[%s3 + $0x10] sm:$0xf]
    %v1180 = vld [vmem:[%s3 + $0x14] sm:$0xf]
    %v1181 = vld [vmem:[%s3 + $0x18] sm:$0xf]
    %v1182 = vld [vmem:[%s3 + $0x1c] sm:$0xf]
    %v1183 = vld [vmem:[%s4] sm:$0xff]
    %v1184 = vld [vmem:[%s4 + $0x8] sm:$0xff]
    %v1185 = vld [vmem:[%s4 + $0x10] sm:$0xff]
    %v1186 = vld [vmem:[%s4 + $0x18] sm:$0xff]
    %v1187 = vld [vmem:[%s4 + $0x20] sm:$0xff]
    %v1188 = vld [vmem:[%s4 + $0x28] sm:$0xff]
    %v1189 = vld [vmem:[%s4 + $0x30] sm:$0xff]
    %v1190 = vld [vmem:[%s4 + $0x38] sm:$0xff]
    %1192 = vset.pattern.permute.xlu0 0
    %1193 = vperm.xlu0 %1192, %v1183
    %v1194 = vpop.permute.xlu0 %1193
    %1197 = vset.pattern.permute.xlu0 0
    %1198 = vperm.xlu0 %1197, %v1184
    %v1199 = vpop.permute.xlu0 %1198
    %1202 = vset.pattern.permute.xlu0 0
    %1203 = vperm.xlu0 %1202, %v1185
    %v1204 = vpop.permute.xlu0 %1203
    %1207 = vset.pattern.permute.xlu0 0
    %1208 = vperm.xlu0 %1207, %v1186
    %v1209 = vpop.permute.xlu0 %1208
    %1212 = vset.pattern.permute.xlu0 0
    %1213 = vperm.xlu0 %1212, %v1187
    %v1214 = vpop.permute.xlu0 %1213
    %1217 = vset.pattern.permute.xlu0 0
    %1218 = vperm.xlu0 %1217, %v1188
    %v1219 = vpop.permute.xlu0 %1218
    %1222 = vset.pattern.permute.xlu0 0
    %1223 = vperm.xlu0 %1222, %v1189
    %v1224 = vpop.permute.xlu0 %1223
    %1227 = vset.pattern.permute.xlu0 0
    %1228 = vperm.xlu0 %1227, %v1190
    %v1229 = vpop.permute.xlu0 %1228
    %v1239 = vunpack.c.l.b16 %v1175
    %v1240 = vunpack.c.l.b16 %v1176
    %v1241 = vunpack.c.l.b16 %v1177
    %v1242 = vunpack.c.l.b16 %v1178
    %v1243 = vunpack.c.l.b16 %v1179
    %v1244 = vunpack.c.l.b16 %v1180
    %v1245 = vunpack.c.l.b16 %v1181
    %v1246 = vunpack.c.l.b16 %v1182
    %v1247 = vpack.c.b16 %v1240, %v1239
    %v1248 = vpack.c.b16 %v1242, %v1241
    %v1249 = vpack.c.b16 %v1244, %v1243
    %v1250 = vpack.c.b16 %v1246, %v1245
    %1255 = vmatpush.bf16.msra.mxu0 %v1167
    %1256 = vmatpush.bf16.msra.mxu0 %v1159
    %1257 = vmatpush.bf16.msra.mxu0 %v1151
    %1258 = vmatpush.bf16.msra.mxu0 %v1143
    %1259 = vmatpush.bf16.msra.mxu0 %v1135
    %1260 = vmatpush.bf16.msra.mxu0 %v1127
    %1261 = vmatpush.bf16.msra.mxu0 %v1119
    %1262 = vmatpush.bf16.msra.mxu0 %v1111
    %1263 = vmatmul.bf16.gmra.mxu0 %v1247
    %v1264 = vpop.f32.mrf.mxu0
    %v1265 = vadd.f32 %v1194, %v1264
    %v1266 = vpop.f32.mrf.mxu0
    %v1267 = vadd.f32 %v1199, %v1266
    %1268 = vmatmul.bf16.gmra.mxu0 %v1248
    %v1269 = vpop.f32.mrf.mxu0
    %v1270 = vadd.f32 %v1204, %v1269
    %v1271 = vpop.f32.mrf.mxu0
    %v1272 = vadd.f32 %v1209, %v1271
    %1273 = vmatmul.bf16.gmra.mxu0 %v1249
    %v1274 = vpop.f32.mrf.mxu0
    %v1275 = vadd.f32 %v1214, %v1274
    %v1276 = vpop.f32.mrf.mxu0
    %v1277 = vadd.f32 %v1219, %v1276
    %1278 = vmatmul.bf16.gmra.mxu0 %v1250
    %v1279 = vpop.f32.mrf.mxu0
    %v1280 = vadd.f32 %v1224, %v1279
    %v1281 = vpop.f32.mrf.mxu0
    %v1282 = vadd.f32 %v1229, %v1281
    %1283 = vdwg.mxu0
    %1284 = vmatpush.bf16.msra.mxu0 %v1168
    %1285 = vmatpush.bf16.msra.mxu0 %v1160
    %1286 = vmatpush.bf16.msra.mxu0 %v1152
    %1287 = vmatpush.bf16.msra.mxu0 %v1144
    %1288 = vmatpush.bf16.msra.mxu0 %v1136
    %1289 = vmatpush.bf16.msra.mxu0 %v1128
    %1290 = vmatpush.bf16.msra.mxu0 %v1120
    %1291 = vmatpush.bf16.msra.mxu0 %v1112
    %1292 = vmatmul.bf16.gmra.mxu0 %v1247
    %v1293 = vpop.f32.mrf.mxu0
    %v1294 = vadd.f32 %v1194, %v1293
    %v1295 = vpop.f32.mrf.mxu0
    %v1296 = vadd.f32 %v1199, %v1295
    %1297 = vmatmul.bf16.gmra.mxu0 %v1248
    %v1298 = vpop.f32.mrf.mxu0
    %v1299 = vadd.f32 %v1204, %v1298
    %v1300 = vpop.f32.mrf.mxu0
    %v1301 = vadd.f32 %v1209, %v1300
    %1302 = vmatmul.bf16.gmra.mxu0 %v1249
    %v1303 = vpop.f32.mrf.mxu0
    %v1304 = vadd.f32 %v1214, %v1303
    %v1305 = vpop.f32.mrf.mxu0
    %v1306 = vadd.f32 %v1219, %v1305
    %1307 = vmatmul.bf16.gmra.mxu0 %v1250
    %v1308 = vpop.f32.mrf.mxu0
    %v1309 = vadd.f32 %v1224, %v1308
    %v1310 = vpop.f32.mrf.mxu0
    %v1311 = vadd.f32 %v1229, %v1310
    %1312 = vdwg.mxu0
    %1313 = vmatpush.bf16.msra.mxu0 %v1169
    %1314 = vmatpush.bf16.msra.mxu0 %v1161
    %1315 = vmatpush.bf16.msra.mxu0 %v1153
    %1316 = vmatpush.bf16.msra.mxu0 %v1145
    %1317 = vmatpush.bf16.msra.mxu0 %v1137
    %1318 = vmatpush.bf16.msra.mxu0 %v1129
    %1319 = vmatpush.bf16.msra.mxu0 %v1121
    %1320 = vmatpush.bf16.msra.mxu0 %v1113
    %1321 = vmatmul.bf16.gmra.mxu0 %v1247
    %v1322 = vpop.f32.mrf.mxu0
    %v1323 = vadd.f32 %v1194, %v1322
    %v1324 = vpop.f32.mrf.mxu0
    %v1325 = vadd.f32 %v1199, %v1324
    %1326 = vmatmul.bf16.gmra.mxu0 %v1248
    %v1327 = vpop.f32.mrf.mxu0
    %v1328 = vadd.f32 %v1204, %v1327
    %v1329 = vpop.f32.mrf.mxu0
    %v1330 = vadd.f32 %v1209, %v1329
    %1331 = vmatmul.bf16.gmra.mxu0 %v1249
    %v1332 = vpop.f32.mrf.mxu0
    %v1333 = vadd.f32 %v1214, %v1332
    %v1334 = vpop.f32.mrf.mxu0
    %v1335 = vadd.f32 %v1219, %v1334
    %1336 = vmatmul.bf16.gmra.mxu0 %v1250
    %v1337 = vpop.f32.mrf.mxu0
    %v1338 = vadd.f32 %v1224, %v1337
    %v1339 = vpop.f32.mrf.mxu0
    %v1340 = vadd.f32 %v1229, %v1339
    %1341 = vdwg.mxu0
    %1342 = vmatpush.bf16.msra.mxu0 %v1170
    %1343 = vmatpush.bf16.msra.mxu0 %v1162
    %1344 = vmatpush.bf16.msra.mxu0 %v1154
    %1345 = vmatpush.bf16.msra.mxu0 %v1146
    %1346 = vmatpush.bf16.msra.mxu0 %v1138
    %1347 = vmatpush.bf16.msra.mxu0 %v1130
    %1348 = vmatpush.bf16.msra.mxu0 %v1122
    %1349 = vmatpush.bf16.msra.mxu0 %v1114
    %1350 = vmatmul.bf16.gmra.mxu0 %v1247
    %v1351 = vpop.f32.mrf.mxu0
    %v1352 = vadd.f32 %v1194, %v1351
    %v1353 = vpop.f32.mrf.mxu0
    %v1354 = vadd.f32 %v1199, %v1353
    %1355 = vmatmul.bf16.gmra.mxu0 %v1248
    %v1356 = vpop.f32.mrf.mxu0
    %v1357 = vadd.f32 %v1204, %v1356
    %v1358 = vpop.f32.mrf.mxu0
    %v1359 = vadd.f32 %v1209, %v1358
    %1360 = vmatmul.bf16.gmra.mxu0 %v1249
    %v1361 = vpop.f32.mrf.mxu0
    %v1362 = vadd.f32 %v1214, %v1361
    %v1363 = vpop.f32.mrf.mxu0
    %v1364 = vadd.f32 %v1219, %v1363
    %1365 = vmatmul.bf16.gmra.mxu0 %v1250
    %v1366 = vpop.f32.mrf.mxu0
    %v1367 = vadd.f32 %v1224, %v1366
    %v1368 = vpop.f32.mrf.mxu0
    %v1369 = vadd.f32 %v1229, %v1368
    %1370 = vdwg.mxu0
    %1371 = vmatpush.bf16.msra.mxu0 %v1171
    %1372 = vmatpush.bf16.msra.mxu0 %v1163
    %1373 = vmatpush.bf16.msra.mxu0 %v1155
    %1374 = vmatpush.bf16.msra.mxu0 %v1147
    %1375 = vmatpush.bf16.msra.mxu0 %v1139
    %1376 = vmatpush.bf16.msra.mxu0 %v1131
    %1377 = vmatpush.bf16.msra.mxu0 %v1123
    %1378 = vmatpush.bf16.msra.mxu0 %v1115
    %1379 = vmatmul.bf16.gmra.mxu0 %v1247
    %v1380 = vpop.f32.mrf.mxu0
    %v1381 = vadd.f32 %v1194, %v1380
    %v1382 = vpop.f32.mrf.mxu0
    %v1383 = vadd.f32 %v1199, %v1382
    %1384 = vmatmul.bf16.gmra.mxu0 %v1248
    %v1385 = vpop.f32.mrf.mxu0
    %v1386 = vadd.f32 %v1204, %v1385
    %v1387 = vpop.f32.mrf.mxu0
    %v1388 = vadd.f32 %v1209, %v1387
    %1389 = vmatmul.bf16.gmra.mxu0 %v1249
    %v1390 = vpop.f32.mrf.mxu0
    %v1391 = vadd.f32 %v1214, %v1390
    %v1392 = vpop.f32.mrf.mxu0
    %v1393 = vadd.f32 %v1219, %v1392
    %1394 = vmatmul.bf16.gmra.mxu0 %v1250
    %v1395 = vpop.f32.mrf.mxu0
    %v1396 = vadd.f32 %v1224, %v1395
    %v1397 = vpop.f32.mrf.mxu0
    %v1398 = vadd.f32 %v1229, %v1397
    %1399 = vdwg.mxu0
    %1400 = vmatpush.bf16.msra.mxu0 %v1172
    %1401 = vmatpush.bf16.msra.mxu0 %v1164
    %1402 = vmatpush.bf16.msra.mxu0 %v1156
    %1403 = vmatpush.bf16.msra.mxu0 %v1148
    %1404 = vmatpush.bf16.msra.mxu0 %v1140
    %1405 = vmatpush.bf16.msra.mxu0 %v1132
    %1406 = vmatpush.bf16.msra.mxu0 %v1124
    %1407 = vmatpush.bf16.msra.mxu0 %v1116
    %1408 = vmatmul.bf16.gmra.mxu0 %v1247
    %v1409 = vpop.f32.mrf.mxu0
    %v1410 = vadd.f32 %v1194, %v1409
    %v1411 = vpop.f32.mrf.mxu0
    %v1412 = vadd.f32 %v1199, %v1411
    %1413 = vmatmul.bf16.gmra.mxu0 %v1248
    %v1414 = vpop.f32.mrf.mxu0
    %v1415 = vadd.f32 %v1204, %v1414
    %v1416 = vpop.f32.mrf.mxu0
    %v1417 = vadd.f32 %v1209, %v1416
    %1418 = vmatmul.bf16.gmra.mxu0 %v1249
    %v1419 = vpop.f32.mrf.mxu0
    %v1420 = vadd.f32 %v1214, %v1419
    %v1421 = vpop.f32.mrf.mxu0
    %v1422 = vadd.f32 %v1219, %v1421
    %1423 = vmatmul.bf16.gmra.mxu0 %v1250
    %v1424 = vpop.f32.mrf.mxu0
    %v1425 = vadd.f32 %v1224, %v1424
    %v1426 = vpop.f32.mrf.mxu0
    %v1427 = vadd.f32 %v1229, %v1426
    %1428 = vdwg.mxu0
    %1429 = vmatpush.bf16.msra.mxu0 %v1173
    %1430 = vmatpush.bf16.msra.mxu0 %v1165
    %1431 = vmatpush.bf16.msra.mxu0 %v1157
    %1432 = vmatpush.bf16.msra.mxu0 %v1149
    %1433 = vmatpush.bf16.msra.mxu0 %v1141
    %1434 = vmatpush.bf16.msra.mxu0 %v1133
    %1435 = vmatpush.bf16.msra.mxu0 %v1125
    %1436 = vmatpush.bf16.msra.mxu0 %v1117
    %1437 = vmatmul.bf16.gmra.mxu0 %v1247
    %v1438 = vpop.f32.mrf.mxu0
    %v1439 = vadd.f32 %v1194, %v1438
    %v1440 = vpop.f32.mrf.mxu0
    %v1441 = vadd.f32 %v1199, %v1440
    %1442 = vmatmul.bf16.gmra.mxu0 %v1248
    %v1443 = vpop.f32.mrf.mxu0
    %v1444 = vadd.f32 %v1204, %v1443
    %v1445 = vpop.f32.mrf.mxu0
    %v1446 = vadd.f32 %v1209, %v1445
    %1447 = vmatmul.bf16.gmra.mxu0 %v1249
    %v1448 = vpop.f32.mrf.mxu0
    %v1449 = vadd.f32 %v1214, %v1448
    %v1450 = vpop.f32.mrf.mxu0
    %v1451 = vadd.f32 %v1219, %v1450
    %1452 = vmatmul.bf16.gmra.mxu0 %v1250
    %v1453 = vpop.f32.mrf.mxu0
    %v1454 = vadd.f32 %v1224, %v1453
    %v1455 = vpop.f32.mrf.mxu0
    %v1456 = vadd.f32 %v1229, %v1455
    %1457 = vdwg.mxu0
    %1458 = vmatpush.bf16.msra.mxu0 %v1174
    %1459 = vmatpush.bf16.msra.mxu0 %v1166
    %1460 = vmatpush.bf16.msra.mxu0 %v1158
    %1461 = vmatpush.bf16.msra.mxu0 %v1150
    %1462 = vmatpush.bf16.msra.mxu0 %v1142
    %1463 = vmatpush.bf16.msra.mxu0 %v1134
    %1464 = vmatpush.bf16.msra.mxu0 %v1126
    %1465 = vmatpush.bf16.msra.mxu0 %v1118
    %1466 = vmatmul.bf16.gmra.mxu0 %v1247
    %v1467 = vpop.f32.mrf.mxu0
    %v1468 = vadd.f32 %v1194, %v1467
    %v1469 = vpop.f32.mrf.mxu0
    %v1470 = vadd.f32 %v1199, %v1469
    %1471 = vmatmul.bf16.gmra.mxu0 %v1248
    %v1472 = vpop.f32.mrf.mxu0
    %v1473 = vadd.f32 %v1204, %v1472
    %v1474 = vpop.f32.mrf.mxu0
    %v1475 = vadd.f32 %v1209, %v1474
    %1476 = vmatmul.bf16.gmra.mxu0 %v1249
    %v1477 = vpop.f32.mrf.mxu0
    %v1478 = vadd.f32 %v1214, %v1477
    %v1479 = vpop.f32.mrf.mxu0
    %v1480 = vadd.f32 %v1219, %v1479
    %1481 = vmatmul.bf16.gmra.mxu0 %v1250
    %v1482 = vpop.f32.mrf.mxu0
    %v1483 = vadd.f32 %v1224, %v1482
    %v1484 = vpop.f32.mrf.mxu0
    %v1485 = vadd.f32 %v1229, %v1484
    %1486 = vdwg.mxu0
    %v1487 = vmax.f32 %v1265, 0.0
    %v1488 = vmax.f32 %v1294, 0.0
    %v1489 = vmax.f32 %v1323, 0.0
    %v1490 = vmax.f32 %v1352, 0.0
    %v1491 = vmax.f32 %v1381, 0.0
    %v1492 = vmax.f32 %v1410, 0.0
    %v1493 = vmax.f32 %v1439, 0.0
    %v1494 = vmax.f32 %v1468, 0.0
    %v1495 = vmax.f32 %v1267, 0.0
    %v1496 = vmax.f32 %v1296, 0.0
    %v1497 = vmax.f32 %v1325, 0.0
    %v1498 = vmax.f32 %v1354, 0.0
    %v1499 = vmax.f32 %v1383, 0.0
    %v1500 = vmax.f32 %v1412, 0.0
    %v1501 = vmax.f32 %v1441, 0.0
    %v1502 = vmax.f32 %v1470, 0.0
    %v1503 = vmax.f32 %v1270, 0.0
    %v1504 = vmax.f32 %v1299, 0.0
    %v1505 = vmax.f32 %v1328, 0.0
    %v1506 = vmax.f32 %v1357, 0.0
    %v1507 = vmax.f32 %v1386, 0.0
    %v1508 = vmax.f32 %v1415, 0.0
    %v1509 = vmax.f32 %v1444, 0.0
    %v1510 = vmax.f32 %v1473, 0.0
    %v1511 = vmax.f32 %v1272, 0.0
    %v1512 = vmax.f32 %v1301, 0.0
    %v1513 = vmax.f32 %v1330, 0.0
    %v1514 = vmax.f32 %v1359, 0.0
    %v1515 = vmax.f32 %v1388, 0.0
    %v1516 = vmax.f32 %v1417, 0.0
    %v1517 = vmax.f32 %v1446, 0.0
    %v1518 = vmax.f32 %v1475, 0.0
    %v1519 = vmax.f32 %v1275, 0.0
    %v1520 = vmax.f32 %v1304, 0.0
    %v1521 = vmax.f32 %v1333, 0.0
    %v1522 = vmax.f32 %v1362, 0.0
    %v1523 = vmax.f32 %v1391, 0.0
    %v1524 = vmax.f32 %v1420, 0.0
    %v1525 = vmax.f32 %v1449, 0.0
    %v1526 = vmax.f32 %v1478, 0.0
    %v1527 = vmax.f32 %v1277, 0.0
    %v1528 = vmax.f32 %v1306, 0.0
    %v1529 = vmax.f32 %v1335, 0.0
    %v1530 = vmax.f32 %v1364, 0.0
    %v1531 = vmax.f32 %v1393, 0.0
    %v1532 = vmax.f32 %v1422, 0.0
    %v1533 = vmax.f32 %v1451, 0.0
    %v1534 = vmax.f32 %v1480, 0.0
    %v1535 = vmax.f32 %v1280, 0.0
    %v1536 = vmax.f32 %v1309, 0.0
    %v1537 = vmax.f32 %v1338, 0.0
    %v1538 = vmax.f32 %v1367, 0.0
    %v1539 = vmax.f32 %v1396, 0.0
    %v1540 = vmax.f32 %v1425, 0.0
    %v1541 = vmax.f32 %v1454, 0.0
    %v1542 = vmax.f32 %v1483, 0.0
    %v1543 = vmax.f32 %v1282, 0.0
    %v1544 = vmax.f32 %v1311, 0.0
    %v1545 = vmax.f32 %v1340, 0.0
    %v1546 = vmax.f32 %v1369, 0.0
    %v1547 = vmax.f32 %v1398, 0.0
    %v1548 = vmax.f32 %v1427, 0.0
    %v1549 = vmax.f32 %v1456, 0.0
    %v1550 = vmax.f32 %v1485, 0.0
    %v1551 = vpack.c.bf16 %v1495, %v1487
    %v1552 = vpack.c.bf16 %v1496, %v1488
    %v1553 = vpack.c.bf16 %v1497, %v1489
    %v1554 = vpack.c.bf16 %v1498, %v1490
    %v1555 = vpack.c.bf16 %v1499, %v1491
    %v1556 = vpack.c.bf16 %v1500, %v1492
    %v1557 = vpack.c.bf16 %v1501, %v1493
    %v1558 = vpack.c.bf16 %v1502, %v1494
    %v1559 = vpack.c.bf16 %v1511, %v1503
    %v1560 = vpack.c.bf16 %v1512, %v1504
    %v1561 = vpack.c.bf16 %v1513, %v1505
    %v1562 = vpack.c.bf16 %v1514, %v1506
    %v1563 = vpack.c.bf16 %v1515, %v1507
    %v1564 = vpack.c.bf16 %v1516, %v1508
    %v1565 = vpack.c.bf16 %v1517, %v1509
    %v1566 = vpack.c.bf16 %v1518, %v1510
    %v1567 = vpack.c.bf16 %v1527, %v1519
    %v1568 = vpack.c.bf16 %v1528, %v1520
    %v1569 = vpack.c.bf16 %v1529, %v1521
    %v1570 = vpack.c.bf16 %v1530, %v1522
    %v1571 = vpack.c.bf16 %v1531, %v1523
    %v1572 = vpack.c.bf16 %v1532, %v1524
    %v1573 = vpack.c.bf16 %v1533, %v1525
    %v1574 = vpack.c.bf16 %v1534, %v1526
    %v1575 = vpack.c.bf16 %v1543, %v1535
    %v1576 = vpack.c.bf16 %v1544, %v1536
    %v1577 = vpack.c.bf16 %v1545, %v1537
    %v1578 = vpack.c.bf16 %v1546, %v1538
    %v1579 = vpack.c.bf16 %v1547, %v1539
    %v1580 = vpack.c.bf16 %v1548, %v1540
    %v1581 = vpack.c.bf16 %v1549, %v1541
    %v1582 = vpack.c.bf16 %v1550, %v1542
    %v1583 = vld [vmem:[%s5] sm:$0x1]
    %v1584 = vld [vmem:[#allocation2] sm:$0x1]
    %1586 = vset.pattern.permute.xlu0 0
    %1587 = vperm.xlu0 %1586, %v1584
    %v1588 = vpop.permute.xlu0 %1587
    %v1590 = vperm.slane %v1588, 0
    %vm1591 = vcmask 523264
    %v1593 = vsel %vm1591, %v1583, 0
    %1595 = vmatpush.bf16.msra.mxu0 0
    %1596 = vmatpush.bf16.msra.mxu0 0
    %1597 = vmatpush.bf16.msra.mxu0 0
    %1598 = vmatpush.bf16.msra.mxu0 0
    %1599 = vmatpush.bf16.msra.mxu0 %v1575
    %1600 = vmatpush.bf16.msra.mxu0 %v1567
    %1601 = vmatpush.bf16.msra.mxu0 %v1559
    %1602 = vmatpush.bf16.msra.mxu0 %v1551
    %1603 = vmatmul.bf16.gmra.mxu0 %v1593
    %v1604 = vpop.f32.mrf.mxu0
    %v1605 = vadd.f32 %v1590, %v1604
    %v1606 = vpop.f32.mrf.mxu0
    %1607 = vdwg.mxu0
    %1608 = vmatpush.bf16.msra.mxu0 0
    %1609 = vmatpush.bf16.msra.mxu0 0
    %1610 = vmatpush.bf16.msra.mxu0 0
    %1611 = vmatpush.bf16.msra.mxu0 0
    %1612 = vmatpush.bf16.msra.mxu0 %v1576
    %1613 = vmatpush.bf16.msra.mxu0 %v1568
    %1614 = vmatpush.bf16.msra.mxu0 %v1560
    %1615 = vmatpush.bf16.msra.mxu0 %v1552
    %1616 = vmatmul.bf16.gmra.mxu0 %v1593
    %v1617 = vpop.f32.mrf.mxu0
    %v1618 = vadd.f32 %v1590, %v1617
    %v1619 = vpop.f32.mrf.mxu0
    %1620 = vdwg.mxu0
    %1621 = vmatpush.bf16.msra.mxu0 0
    %1622 = vmatpush.bf16.msra.mxu0 0
    %1623 = vmatpush.bf16.msra.mxu0 0
    %1624 = vmatpush.bf16.msra.mxu0 0
    %1625 = vmatpush.bf16.msra.mxu0 %v1577
    %1626 = vmatpush.bf16.msra.mxu0 %v1569
    %1627 = vmatpush.bf16.msra.mxu0 %v1561
    %1628 = vmatpush.bf16.msra.mxu0 %v1553
    %1629 = vmatmul.bf16.gmra.mxu0 %v1593
    %v1630 = vpop.f32.mrf.mxu0
    %v1631 = vadd.f32 %v1590, %v1630
    %v1632 = vpop.f32.mrf.mxu0
    %1633 = vdwg.mxu0
    %1634 = vmatpush.bf16.msra.mxu0 0
    %1635 = vmatpush.bf16.msra.mxu0 0
    %1636 = vmatpush.bf16.msra.mxu0 0
    %1637 = vmatpush.bf16.msra.mxu0 0
    %1638 = vmatpush.bf16.msra.mxu0 %v1578
    %1639 = vmatpush.bf16.msra.mxu0 %v1570
    %1640 = vmatpush.bf16.msra.mxu0 %v1562
    %1641 = vmatpush.bf16.msra.mxu0 %v1554
    %1642 = vmatmul.bf16.gmra.mxu0 %v1593
    %v1643 = vpop.f32.mrf.mxu0
    %v1644 = vadd.f32 %v1590, %v1643
    %v1645 = vpop.f32.mrf.mxu0
    %1646 = vdwg.mxu0
    %1647 = vmatpush.bf16.msra.mxu0 0
    %1648 = vmatpush.bf16.msra.mxu0 0
    %1649 = vmatpush.bf16.msra.mxu0 0
    %1650 = vmatpush.bf16.msra.mxu0 0
    %1651 = vmatpush.bf16.msra.mxu0 %v1579
    %1652 = vmatpush.bf16.msra.mxu0 %v1571
    %1653 = vmatpush.bf16.msra.mxu0 %v1563
    %1654 = vmatpush.bf16.msra.mxu0 %v1555
    %1655 = vmatmul.bf16.gmra.mxu0 %v1593
    %v1656 = vpop.f32.mrf.mxu0
    %v1657 = vadd.f32 %v1590, %v1656
    %v1658 = vpop.f32.mrf.mxu0
    %1659 = vdwg.mxu0
    %1660 = vmatpush.bf16.msra.mxu0 0
    %1661 = vmatpush.bf16.msra.mxu0 0
    %1662 = vmatpush.bf16.msra.mxu0 0
    %1663 = vmatpush.bf16.msra.mxu0 0
    %1664 = vmatpush.bf16.msra.mxu0 %v1580
    %1665 = vmatpush.bf16.msra.mxu0 %v1572
    %1666 = vmatpush.bf16.msra.mxu0 %v1564
    %1667 = vmatpush.bf16.msra.mxu0 %v1556
    %1668 = vmatmul.bf16.gmra.mxu0 %v1593
    %v1669 = vpop.f32.mrf.mxu0
    %v1670 = vadd.f32 %v1590, %v1669
    %v1671 = vpop.f32.mrf.mxu0
    %1672 = vdwg.mxu0
    %1673 = vmatpush.bf16.msra.mxu0 0
    %1674 = vmatpush.bf16.msra.mxu0 0
    %1675 = vmatpush.bf16.msra.mxu0 0
    %1676 = vmatpush.bf16.msra.mxu0 0
    %1677 = vmatpush.bf16.msra.mxu0 %v1581
    %1678 = vmatpush.bf16.msra.mxu0 %v1573
    %1679 = vmatpush.bf16.msra.mxu0 %v1565
    %1680 = vmatpush.bf16.msra.mxu0 %v1557
    %1681 = vmatmul.bf16.gmra.mxu0 %v1593
    %v1682 = vpop.f32.mrf.mxu0
    %v1683 = vadd.f32 %v1590, %v1682
    %v1684 = vpop.f32.mrf.mxu0
    %1685 = vdwg.mxu0
    %1686 = vmatpush.bf16.msra.mxu0 0
    %1687 = vmatpush.bf16.msra.mxu0 0
    %1688 = vmatpush.bf16.msra.mxu0 0
    %1689 = vmatpush.bf16.msra.mxu0 0
    %1690 = vmatpush.bf16.msra.mxu0 %v1582
    %1691 = vmatpush.bf16.msra.mxu0 %v1574
    %1692 = vmatpush.bf16.msra.mxu0 %v1566
    %1693 = vmatpush.bf16.msra.mxu0 %v1558
    %1694 = vmatmul.bf16.gmra.mxu0 %v1593
    %v1695 = vpop.f32.mrf.mxu0
    %v1696 = vadd.f32 %v1590, %v1695
    %v1697 = vpop.f32.mrf.mxu0
    %1698 = vdwg.mxu0
    %v1699 = vmax.f32 %v1605, -30.0
    %v1700 = vmax.f32 %v1618, -30.0
    %v1701 = vmax.f32 %v1631, -30.0
    %v1702 = vmax.f32 %v1644, -30.0
    %v1703 = vmax.f32 %v1657, -30.0
    %v1704 = vmax.f32 %v1670, -30.0
    %v1705 = vmax.f32 %v1683, -30.0
    %v1706 = vmax.f32 %v1696, -30.0
    %v1707 = vmin.f32 %v1699, 30.0
    %v1708 = vmin.f32 %v1700, 30.0
    %v1709 = vmin.f32 %v1701, 30.0
    %v1710 = vmin.f32 %v1702, 30.0
    %v1711 = vmin.f32 %v1703, 30.0
    %v1712 = vmin.f32 %v1704, 30.0
    %v1713 = vmin.f32 %v1705, 30.0
    %v1714 = vmin.f32 %v1706, 30.0
    %v1715 = vsub.f32 0.0, %v1707
    %v1716 = vsub.f32 0.0, %v1708
    %v1717 = vsub.f32 0.0, %v1709
    %v1718 = vsub.f32 0.0, %v1710
    %v1719 = vsub.f32 0.0, %v1711
    %v1720 = vsub.f32 0.0, %v1712
    %v1721 = vsub.f32 0.0, %v1713
    %v1722 = vsub.f32 0.0, %v1714
    %v1723 = vmul.f32 %v1715, 1.442695
    %v1724 = vpow.pop %v1723
    %v1725 = vmul.f32 %v1716, 1.442695
    %v1726 = vpow.pop %v1725
    %v1727 = vmul.f32 %v1717, 1.442695
    %v1728 = vpow.pop %v1727
    %v1729 = vmul.f32 %v1718, 1.442695
    %v1730 = vpow.pop %v1729
    %v1731 = vmul.f32 %v1719, 1.442695
    %v1732 = vpow.pop %v1731
    %v1733 = vmul.f32 %v1720, 1.442695
    %v1734 = vpow.pop %v1733
    %v1735 = vmul.f32 %v1721, 1.442695
    %v1736 = vpow.pop %v1735
    %v1737 = vmul.f32 %v1722, 1.442695
    %v1738 = vpow.pop %v1737
    %v1739 = vadd.f32 %v1724, 1.0
    %v1740 = vadd.f32 %v1726, 1.0
    %v1741 = vadd.f32 %v1728, 1.0
    %v1742 = vadd.f32 %v1730, 1.0
    %v1743 = vadd.f32 %v1732, 1.0
    %v1744 = vadd.f32 %v1734, 1.0
    %v1745 = vadd.f32 %v1736, 1.0
    %v1746 = vadd.f32 %v1738, 1.0
    %v1747 = vrcp.pop %v1739
    %v1748 = vrcp.pop %v1740
    %v1749 = vrcp.pop %v1741
    %v1750 = vrcp.pop %v1742
    %v1751 = vrcp.pop %v1743
    %v1752 = vrcp.pop %v1744
    %v1753 = vrcp.pop %v1745
    %v1754 = vrcp.pop %v1746
    %v1763 = vrot.slane %v1748, 7
    %v1764 = vrot.slane %v1749, 6
    %v1765 = vrot.slane %v1750, 5
    %v1766 = vrot.slane %v1751, 4
    %v1767 = vrot.slane %v1752, 3
    %v1768 = vrot.slane %v1753, 2
    %v1769 = vrot.slane %v1754, 1
    %vm1770 = vcmask 1040384
    %v1771 = vsel %vm1770, %v1747, %v1763
    %vm1772 = vcmask 1042434
    %v1773 = vsel %vm1772, %v1764, %v1765
    %vm1774 = vcmask 1041408
    %v1775 = vsel %vm1774, %v1771, %v1773
    %vm1776 = vcmask 1044484
    %v1777 = vsel %vm1776, %v1766, %v1767
    %vm1778 = vcmask 1046534
    %v1779 = vsel %vm1778, %v1768, %v1769
    %vm1780 = vcmask 1045508
    %v1781 = vsel %vm1780, %v1777, %v1779
    %vm1782 = vcmask 1043456
    %v1783 = vsel %vm1782, %v1775, %v1781
    %1785 = vst [vmem:[#allocation3] sm:$0xff] %v1783
    // Predicated region
    $region30: #{tpu_custom_call.1} parent=1 // pred_check
      _
    $region31: #{tpu_custom_call.1} parent=1 // pred_check_branch
      %1787 = sbr.rel (0) target = $region33
    $region32: #{tpu_custom_call.1} parent=1 // pred_region
      %1789 = vsyncadd [#allocation4], 0
      %s1791 = sshll.u32 [#allocation3], 4
      %s1792 = int_to_ptr.vmem [resolvable:$true] %s1791
      %s1793 = sshll.u32 %s7, 4
      %s1794 = int_to_ptr.hbm [resolvable:$true] %s1793
      %1796 = dma.vmem_to_hbm [thread:$0]  %s1792, 128, %s1794, [#allocation4]
    $region33: #{tpu_custom_call.1} parent=1 // pred_fallthru
      _
    // Predicated region
    $region34: #{tpu_custom_call.1} parent=1 // pred_check
      _
    $region35: #{tpu_custom_call.1} parent=1 // pred_check_branch
      %1798 = sbr.rel (0) target = $region37
    $region36: #{tpu_custom_call.1} parent=1 // pred_region
      %1800 = dma.done [#allocation4], 128
    $region37: #{tpu_custom_call.1} parent=1 // pred_fallthru
      _
    %1801 = vsyncpa [#allocation4], 1

</llo_original>
